<compile_context>
chip_gen: v7x
topology: tpu7x:2x2x1
jax: 0.10.0
libtpu: 0.0.40
codegen_flags: <defaults>
</compile_context>

<pallas_src>
import functools

import jax
import jax.numpy as jnp
import numpy as np
from jax.experimental import pallas as pl
from jax.experimental.pallas import tpu as pltpu


def _gaussian_head_kernel(x_ref, w1_ref, b1_ref, w2_ref, b2_ref, o_ref,
                          taps1_ref, taps2_ref, *, H, W):
    """Fused conv2(conv1(x)) for one lane-block of images.

    x_ref     : (Cin, L)      activations, images lane-contiguous (L = n*H*W)
    w1_ref    : (C1, 9*Cin)   packed conv1 weight (tap-major, channel-minor)
    b1_ref    : (C1, 1)       conv1 bias
    w2_ref    : (C2, 9*C1)    packed conv2 weight
    b2_ref    : (C2, 1)       conv2 bias
    o_ref     : (C2, L)       output
    taps1_ref : (9*Cin, L)    VMEM scratch: conv1 im2col matrix
    taps2_ref : (9*C1, L)     VMEM scratch: conv2 im2col matrix
    """
    L = x_ref.shape[1]
    HW = H * W

    # ---- positions & boundary masks: built once, reused for both convs ----
    p = jax.lax.broadcasted_iota(jnp.int32, (1, L), 1)
    p_img = (p & (HW - 1)) if (HW & (HW - 1)) == 0 else (p % HW)
    if (W & (W - 1)) == 0:
        row = p_img >> (W.bit_length() - 1)
        col = p_img & (W - 1)
    else:
        row = p_img // W
        col = p_img % W
    top = row >= 1          # tap may read row-1
    bot = row <= H - 2      # tap may read row+1
    left = col >= 1         # tap may read col-1
    right = col <= W - 2    # tap may read col+1
    masks = {
        (-1, -1): top & left, (-1, 0): top,  (-1, 1): top & right,
        (0, -1):  left,       (0, 0):  None, (0, 1):  right,
        (1, -1):  bot & left, (1, 0):  bot,  (1, 1):  bot & right,
    }

    def write_im2col(x, taps_ref):
        # Zero "same" padding via lane-roll + boundary mask.  This is only
        # valid for kernel=3x3 / stride=1 / pad=1 with images lane-contiguous:
        # the masked lanes are exactly the ones whose roll would bleed across
        # an image boundary (or wrap around the buffer).  Larger kernels,
        # dilation or stride would need a real halo.
        C = x.shape[0]
        t = 0
        for dy in (-1, 0, 1):
            for dx in (-1, 0, 1):
                s = dy * W + dx
                shifted = x if s == 0 else pltpu.roll(x, shift=(-s) % L, axis=1)
                m = masks[(dy, dx)]
                if m is not None:
                    shifted = jnp.where(m, shifted, 0.0)
                taps_ref[t * C:(t + 1) * C, :] = shifted
                t += 1

    # conv1: single K = 9*Cin MXU contraction, f32 accumulate.
    write_im2col(x_ref[...], taps1_ref)
    h = jnp.dot(w1_ref[...], taps1_ref[...],
                preferred_element_type=jnp.float32) + b1_ref[...]

    # conv2: hidden activation stays on chip; single K = 9*C1 contraction.
    write_im2col(h, taps2_ref)
    y = jnp.dot(w2_ref[...], taps2_ref[...],
                preferred_element_type=jnp.float32) + b2_ref[...]

    o_ref[...] = y.astype(o_ref.dtype)


def pack_conv3x3_weight(w_hwio):
    """(3, 3, Cin, Cout) HWIO -> (Cout, 9*Cin), tap-major / channel-minor."""
    kh, kw, cin, cout = w_hwio.shape
    return jnp.transpose(w_hwio, (3, 0, 1, 2)).reshape(cout, kh * kw * cin)


def gaussian_head_forward(x_nchw, w1p, b1, w2p, b2, *, batch_blocks=1):
    """Fused conv2(conv1(x)) for NCHW input, both convs 3x3 / stride 1 / pad 1.

    batch_blocks=1 -> single grid step (best on v5e/v6e: 1 TC per chip).
    batch_blocks=2 -> 2-way "parallel" grid axis for v7x megacore.
    """
    N, Cin, H, W = x_nchw.shape
    HW = H * W
    C1 = w1p.shape[0]
    C2 = w2p.shape[0]
    assert N % batch_blocks == 0
    Lb = (N // batch_blocks) * HW       # lanes handled per grid step

    # Channel-major with batch flattened onto lanes: (Cin, N*H*W), each image
    # occupying a contiguous run of H*W lanes.
    x_cl = jnp.transpose(x_nchw.reshape(N, Cin, HW), (1, 0, 2)).reshape(Cin, N * HW)

    y_cl = pl.pallas_call(
        functools.partial(_gaussian_head_kernel, H=H, W=W),
        out_shape=jax.ShapeDtypeStruct((C2, N * HW), x_nchw.dtype),
        grid=(batch_blocks,),
        in_specs=[
            pl.BlockSpec((Cin, Lb), lambda g: (0, g)),
            pl.BlockSpec((C1, 9 * Cin), lambda g: (0, 0)),
            pl.BlockSpec((C1, 1), lambda g: (0, 0)),
            pl.BlockSpec((C2, 9 * C1), lambda g: (0, 0)),
            pl.BlockSpec((C2, 1), lambda g: (0, 0)),
        ],
        out_specs=pl.BlockSpec((C2, Lb), lambda g: (0, g)),
        scratch_shapes=[
            pltpu.VMEM((9 * Cin, Lb), jnp.float32),
            pltpu.VMEM((9 * C1, Lb), jnp.float32),
        ],
        compiler_params=pltpu.CompilerParams(
            dimension_semantics=("parallel",)),
    )(x_cl, w1p, b1.reshape(C1, 1), w2p, b2.reshape(C2, 1))

    return jnp.transpose(y_cl.reshape(C2, N, HW), (1, 0, 2)).reshape(N, C2, H, W)


class GaussianHeadPallas:
    """GaussianHead.forward(x) = conv2(conv1(x)), both 3x3 / pad=1 convs."""

    def __init__(self, input_dim=8, hidden_dim=16, mixtures=4, key=None):
        if key is None:
            key = jax.random.PRNGKey(0)
        k1, k2, k3, k4 = jax.random.split(key, 4)
        out_dim = 2 * mixtures
        # Deterministic synthetic init (HWIO layout for reference / packing).
        self.w1 = (jax.random.normal(k1, (3, 3, input_dim, hidden_dim),
                                     jnp.float32) * 0.05)
        self.b1 = (jax.random.normal(k2, (hidden_dim,), jnp.float32) * 0.05)
        self.w2 = (jax.random.normal(k3, (3, 3, hidden_dim, out_dim),
                                     jnp.float32) * 0.05)
        self.b2 = (jax.random.normal(k4, (out_dim,), jnp.float32) * 0.05)
        # Packed (Cout, 9*Cin) weights for the single-contraction kernel.
        self.w1p = pack_conv3x3_weight(self.w1)
        self.w2p = pack_conv3x3_weight(self.w2)

    def __call__(self, x_nchw, *, batch_blocks=1):
        return gaussian_head_forward(x_nchw, self.w1p, self.b1,
                                     self.w2p, self.b2,
                                     batch_blocks=batch_blocks)


def _reference(x_nchw, w1, b1, w2, b2):
    """Pure-JAX reference (lax conv, NHWC/HWIO) for correctness check."""
    x = jnp.transpose(x_nchw, (0, 2, 3, 1))
    dn = jax.lax.conv_dimension_numbers(x.shape, w1.shape,
                                        ("NHWC", "HWIO", "NHWC"))
    h = jax.lax.conv_general_dilated(x, w1, (1, 1), "SAME",
                                     dimension_numbers=dn) + b1
    y = jax.lax.conv_general_dilated(h, w2, (1, 1), "SAME",
                                     dimension_numbers=dn) + b2
    return jnp.transpose(y, (0, 3, 1, 2))


if __name__ == "__main__":
    # Small shapes consistent with the module (defaults 128/256/9 scaled down).
    N, C_IN, H, W = 2, 8, 16, 16
    HIDDEN, MIXTURES = 16, 4

    key = jax.random.PRNGKey(0)
    kx, kp = jax.random.split(key)
    x = jax.random.normal(kx, (N, C_IN, H, W), jnp.float32)   # NCHW input

    head = GaussianHeadPallas(input_dim=C_IN, hidden_dim=HIDDEN,
                              mixtures=MIXTURES, key=kp)

    ref = _reference(x, head.w1, head.b1, head.w2, head.b2)

    # Single grid step: whole batch flattened onto lanes (v5e / v6e path).
    out = jax.block_until_ready(head(x, batch_blocks=1))
    assert out.shape == (N, 2 * MIXTURES, H, W), out.shape
    np.testing.assert_allclose(np.asarray(out), np.asarray(ref),
                               rtol=1e-4, atol=1e-4)

    # 2-way parallel grid (v7x megacore path): one step per TensorCore.
    out2 = jax.block_until_ready(head(x, batch_blocks=2))
    np.testing.assert_allclose(np.asarray(out2), np.asarray(ref),
                               rtol=1e-4, atol=1e-4)

    print("KERNEL_OK")
</pallas_src>

<mosaic_0001>
module attributes {stable_mosaic.version = 11 : i64} {
  func.func @_gaussian_head_kernel(%arg0: i32, %arg1: memref<8x512xf32, #tpu.memory_space<vmem>>, %arg2: memref<16x72xf32, #tpu.memory_space<vmem>>, %arg3: memref<16x1xf32, #tpu.memory_space<vmem>>, %arg4: memref<8x144xf32, #tpu.memory_space<vmem>>, %arg5: memref<8x1xf32, #tpu.memory_space<vmem>>, %arg6: memref<8x512xf32, #tpu.memory_space<vmem>>, %arg7: memref<72x512xf32, #tpu.memory_space<vmem>>, %arg8: memref<144x512xf32, #tpu.memory_space<vmem>>) attributes {dimension_semantics = [#tpu.dimension_semantics<parallel>], iteration_bounds = array<i64: 1>, scalar_prefetch = 0 : i64, scratch_operands = 2 : i64, tpu.core_type = #tpu.core_type<tc>, window_params = [{transform_indices = @transform_0, window_bounds = array<i64: 8, 512>}, {pipeline_mode = #tpu.pipeline_mode<synchronous>, transform_indices = @transform_1, window_bounds = array<i64: 16, 72>}, {pipeline_mode = #tpu.pipeline_mode<synchronous>, transform_indices = @transform_2, window_bounds = array<i64: 16, 1>}, {pipeline_mode = #tpu.pipeline_mode<synchronous>, transform_indices = @transform_3, window_bounds = array<i64: 8, 144>}, {pipeline_mode = #tpu.pipeline_mode<synchronous>, transform_indices = @transform_4, window_bounds = array<i64: 8, 1>}, {transform_indices = @transform_5, window_bounds = array<i64: 8, 512>}]} {
    %0 = tpu.iota {dimensions = array<i32: 1>} : vector<1x512xi32>
    %c255_i32 = arith.constant 255 : i32
    %1 = vector.broadcast %c255_i32 : i32 to vector<1x512xi32>
    %2 = arith.andi %0, %1 : vector<1x512xi32>
    %c4_i32 = arith.constant 4 : i32
    %3 = vector.broadcast %c4_i32 : i32 to vector<1x512xi32>
    %4 = arith.shrsi %2, %3 : vector<1x512xi32>
    %c15_i32 = arith.constant 15 : i32
    %5 = vector.broadcast %c15_i32 : i32 to vector<1x512xi32>
    %6 = arith.andi %2, %5 : vector<1x512xi32>
    %c1_i32 = arith.constant 1 : i32
    %7 = vector.broadcast %c1_i32 : i32 to vector<1x512xi32>
    %8 = arith.cmpi sge, %4, %7 : vector<1x512xi32>
    %c14_i32 = arith.constant 14 : i32
    %9 = vector.broadcast %c14_i32 : i32 to vector<1x512xi32>
    %10 = arith.cmpi sle, %4, %9 : vector<1x512xi32>
    %c1_i32_0 = arith.constant 1 : i32
    %11 = vector.broadcast %c1_i32_0 : i32 to vector<1x512xi32>
    %12 = arith.cmpi sge, %6, %11 : vector<1x512xi32>
    %c14_i32_1 = arith.constant 14 : i32
    %13 = vector.broadcast %c14_i32_1 : i32 to vector<1x512xi32>
    %14 = arith.cmpi sle, %6, %13 : vector<1x512xi32>
    %15 = arith.andi %8, %12 : vector<1x512xi1>
    %16 = arith.andi %8, %14 : vector<1x512xi1>
    %17 = arith.andi %10, %12 : vector<1x512xi1>
    %18 = arith.andi %10, %14 : vector<1x512xi1>
    %c0 = arith.constant 0 : index
    %c0_2 = arith.constant 0 : index
    %19 = vector.load %arg1[%c0, %c0_2] : memref<8x512xf32, #tpu.memory_space<vmem>>, vector<8x512xf32>
    %c17_i32 = arith.constant 17 : i32
    %20 = tpu.dynamic_rotate %19 by %c17_i32 dim 1 : vector<8x512xf32>, i32 -> vector<8x512xf32>
    %cst = arith.constant 0.000000e+00 : f32
    %21 = vector.shape_cast %15 : vector<1x512xi1> to vector<1x512xi1>
    %22 = vector.broadcast %21 : vector<1x512xi1> to vector<8x512xi1>
    %23 = vector.broadcast %cst : f32 to vector<8x512xf32>
    %24 = arith.select %22, %20, %23 : vector<8x512xi1>, vector<8x512xf32>
    %c0_3 = arith.constant 0 : index
    %c0_4 = arith.constant 0 : index
    %25 = vector.load %arg7[%c0_3, %c0_4] : memref<72x512xf32, #tpu.memory_space<vmem>>, vector<8x512xf32>
    tpu.vector_store %arg7[%c0_3, %c0_4], %24 {strides = array<i32>} : memref<72x512xf32, #tpu.memory_space<vmem>>, vector<8x512xf32>,
    %c16_i32 = arith.constant 16 : i32
    %26 = tpu.dynamic_rotate %19 by %c16_i32 dim 1 : vector<8x512xf32>, i32 -> vector<8x512xf32>
    %cst_5 = arith.constant 0.000000e+00 : f32
    %27 = vector.shape_cast %8 : vector<1x512xi1> to vector<1x512xi1>
    %28 = vector.broadcast %27 : vector<1x512xi1> to vector<8x512xi1>
    %29 = vector.broadcast %cst_5 : f32 to vector<8x512xf32>
    %30 = arith.select %28, %26, %29 : vector<8x512xi1>, vector<8x512xf32>
    %c8 = arith.constant 8 : index
    %c0_6 = arith.constant 0 : index
    %31 = vector.load %arg7[%c8, %c0_6] : memref<72x512xf32, #tpu.memory_space<vmem>>, vector<8x512xf32>
    tpu.vector_store %arg7[%c8, %c0_6], %30 {strides = array<i32>} : memref<72x512xf32, #tpu.memory_space<vmem>>, vector<8x512xf32>,
    %c15_i32_7 = arith.constant 15 : i32
    %32 = tpu.dynamic_rotate %19 by %c15_i32_7 dim 1 : vector<8x512xf32>, i32 -> vector<8x512xf32>
    %cst_8 = arith.constant 0.000000e+00 : f32
    %33 = vector.shape_cast %16 : vector<1x512xi1> to vector<1x512xi1>
    %34 = vector.broadcast %33 : vector<1x512xi1> to vector<8x512xi1>
    %35 = vector.broadcast %cst_8 : f32 to vector<8x512xf32>
    %36 = arith.select %34, %32, %35 : vector<8x512xi1>, vector<8x512xf32>
    %c16 = arith.constant 16 : index
    %c0_9 = arith.constant 0 : index
    %37 = vector.load %arg7[%c16, %c0_9] : memref<72x512xf32, #tpu.memory_space<vmem>>, vector<8x512xf32>
    tpu.vector_store %arg7[%c16, %c0_9], %36 {strides = array<i32>} : memref<72x512xf32, #tpu.memory_space<vmem>>, vector<8x512xf32>,
    %c1_i32_10 = arith.constant 1 : i32
    %38 = tpu.dynamic_rotate %19 by %c1_i32_10 dim 1 : vector<8x512xf32>, i32 -> vector<8x512xf32>
    %cst_11 = arith.constant 0.000000e+00 : f32
    %39 = vector.shape_cast %12 : vector<1x512xi1> to vector<1x512xi1>
    %40 = vector.broadcast %39 : vector<1x512xi1> to vector<8x512xi1>
    %41 = vector.broadcast %cst_11 : f32 to vector<8x512xf32>
    %42 = arith.select %40, %38, %41 : vector<8x512xi1>, vector<8x512xf32>
    %c24 = arith.constant 24 : index
    %c0_12 = arith.constant 0 : index
    %43 = vector.load %arg7[%c24, %c0_12] : memref<72x512xf32, #tpu.memory_space<vmem>>, vector<8x512xf32>
    tpu.vector_store %arg7[%c24, %c0_12], %42 {strides = array<i32>} : memref<72x512xf32, #tpu.memory_space<vmem>>, vector<8x512xf32>,
    %c32 = arith.constant 32 : index
    %c0_13 = arith.constant 0 : index
    %44 = vector.load %arg7[%c32, %c0_13] : memref<72x512xf32, #tpu.memory_space<vmem>>, vector<8x512xf32>
    tpu.vector_store %arg7[%c32, %c0_13], %19 {strides = array<i32>} : memref<72x512xf32, #tpu.memory_space<vmem>>, vector<8x512xf32>,
    %c511_i32 = arith.constant 511 : i32
    %45 = tpu.dynamic_rotate %19 by %c511_i32 dim 1 : vector<8x512xf32>, i32 -> vector<8x512xf32>
    %cst_14 = arith.constant 0.000000e+00 : f32
    %46 = vector.shape_cast %14 : vector<1x512xi1> to vector<1x512xi1>
    %47 = vector.broadcast %46 : vector<1x512xi1> to vector<8x512xi1>
    %48 = vector.broadcast %cst_14 : f32 to vector<8x512xf32>
    %49 = arith.select %47, %45, %48 : vector<8x512xi1>, vector<8x512xf32>
    %c40 = arith.constant 40 : index
    %c0_15 = arith.constant 0 : index
    %50 = vector.load %arg7[%c40, %c0_15] : memref<72x512xf32, #tpu.memory_space<vmem>>, vector<8x512xf32>
    tpu.vector_store %arg7[%c40, %c0_15], %49 {strides = array<i32>} : memref<72x512xf32, #tpu.memory_space<vmem>>, vector<8x512xf32>,
    %c497_i32 = arith.constant 497 : i32
    %51 = tpu.dynamic_rotate %19 by %c497_i32 dim 1 : vector<8x512xf32>, i32 -> vector<8x512xf32>
    %cst_16 = arith.constant 0.000000e+00 : f32
    %52 = vector.shape_cast %17 : vector<1x512xi1> to vector<1x512xi1>
    %53 = vector.broadcast %52 : vector<1x512xi1> to vector<8x512xi1>
    %54 = vector.broadcast %cst_16 : f32 to vector<8x512xf32>
    %55 = arith.select %53, %51, %54 : vector<8x512xi1>, vector<8x512xf32>
    %c48 = arith.constant 48 : index
    %c0_17 = arith.constant 0 : index
    %56 = vector.load %arg7[%c48, %c0_17] : memref<72x512xf32, #tpu.memory_space<vmem>>, vector<8x512xf32>
    tpu.vector_store %arg7[%c48, %c0_17], %55 {strides = array<i32>} : memref<72x512xf32, #tpu.memory_space<vmem>>, vector<8x512xf32>,
    %c496_i32 = arith.constant 496 : i32
    %57 = tpu.dynamic_rotate %19 by %c496_i32 dim 1 : vector<8x512xf32>, i32 -> vector<8x512xf32>
    %cst_18 = arith.constant 0.000000e+00 : f32
    %58 = vector.shape_cast %10 : vector<1x512xi1> to vector<1x512xi1>
    %59 = vector.broadcast %58 : vector<1x512xi1> to vector<8x512xi1>
    %60 = vector.broadcast %cst_18 : f32 to vector<8x512xf32>
    %61 = arith.select %59, %57, %60 : vector<8x512xi1>, vector<8x512xf32>
    %c56 = arith.constant 56 : index
    %c0_19 = arith.constant 0 : index
    %62 = vector.load %arg7[%c56, %c0_19] : memref<72x512xf32, #tpu.memory_space<vmem>>, vector<8x512xf32>
    tpu.vector_store %arg7[%c56, %c0_19], %61 {strides = array<i32>} : memref<72x512xf32, #tpu.memory_space<vmem>>, vector<8x512xf32>,
    %c495_i32 = arith.constant 495 : i32
    %63 = tpu.dynamic_rotate %19 by %c495_i32 dim 1 : vector<8x512xf32>, i32 -> vector<8x512xf32>
    %cst_20 = arith.constant 0.000000e+00 : f32
    %64 = vector.shape_cast %18 : vector<1x512xi1> to vector<1x512xi1>
    %65 = vector.broadcast %64 : vector<1x512xi1> to vector<8x512xi1>
    %66 = vector.broadcast %cst_20 : f32 to vector<8x512xf32>
    %67 = arith.select %65, %63, %66 : vector<8x512xi1>, vector<8x512xf32>
    %c64 = arith.constant 64 : index
    %c0_21 = arith.constant 0 : index
    %68 = vector.load %arg7[%c64, %c0_21] : memref<72x512xf32, #tpu.memory_space<vmem>>, vector<8x512xf32>
    tpu.vector_store %arg7[%c64, %c0_21], %67 {strides = array<i32>} : memref<72x512xf32, #tpu.memory_space<vmem>>, vector<8x512xf32>,
    %c0_22 = arith.constant 0 : index
    %c0_23 = arith.constant 0 : index
    %69 = vector.load %arg2[%c0_22, %c0_23] : memref<16x72xf32, #tpu.memory_space<vmem>>, vector<16x72xf32>
    %c0_24 = arith.constant 0 : index
    %c0_25 = arith.constant 0 : index
    %70 = vector.load %arg7[%c0_24, %c0_25] : memref<72x512xf32, #tpu.memory_space<vmem>>, vector<72x512xf32>
    %cst_26 = arith.constant dense<0.000000e+00> : vector<16x512xf32>
    %71 = tpu.matmul %69, %70, %cst_26 {dimension_numbers = #tpu.dot_dimension_numbers<[1], [0], [0], [1], [0, 0, 1, 1], [], []>} : vector<16x72xf32>, vector<72x512xf32>, vector<16x512xf32> -> vector<16x512xf32>
    %c0_27 = arith.constant 0 : index
    %c0_28 = arith.constant 0 : index
    %72 = vector.load %arg3[%c0_27, %c0_28] : memref<16x1xf32, #tpu.memory_space<vmem>>, vector<16x1xf32>
    %73 = vector.broadcast %72 : vector<16x1xf32> to vector<16x512xf32>
    %74 = arith.addf %71, %73 : vector<16x512xf32>
    %c17_i32_29 = arith.constant 17 : i32
    %75 = tpu.dynamic_rotate %74 by %c17_i32_29 dim 1 : vector<16x512xf32>, i32 -> vector<16x512xf32>
    %cst_30 = arith.constant 0.000000e+00 : f32
    %76 = vector.shape_cast %15 : vector<1x512xi1> to vector<1x512xi1>
    %77 = vector.broadcast %76 : vector<1x512xi1> to vector<16x512xi1>
    %78 = vector.broadcast %cst_30 : f32 to vector<16x512xf32>
    %79 = arith.select %77, %75, %78 : vector<16x512xi1>, vector<16x512xf32>
    %c0_31 = arith.constant 0 : index
    %c0_32 = arith.constant 0 : index
    %80 = vector.load %arg8[%c0_31, %c0_32] : memref<144x512xf32, #tpu.memory_space<vmem>>, vector<16x512xf32>
    tpu.vector_store %arg8[%c0_31, %c0_32], %79 {strides = array<i32>} : memref<144x512xf32, #tpu.memory_space<vmem>>, vector<16x512xf32>,
    %c16_i32_33 = arith.constant 16 : i32
    %81 = tpu.dynamic_rotate %74 by %c16_i32_33 dim 1 : vector<16x512xf32>, i32 -> vector<16x512xf32>
    %cst_34 = arith.constant 0.000000e+00 : f32
    %82 = vector.shape_cast %8 : vector<1x512xi1> to vector<1x512xi1>
    %83 = vector.broadcast %82 : vector<1x512xi1> to vector<16x512xi1>
    %84 = vector.broadcast %cst_34 : f32 to vector<16x512xf32>
    %85 = arith.select %83, %81, %84 : vector<16x512xi1>, vector<16x512xf32>
    %c16_35 = arith.constant 16 : index
    %c0_36 = arith.constant 0 : index
    %86 = vector.load %arg8[%c16_35, %c0_36] : memref<144x512xf32, #tpu.memory_space<vmem>>, vector<16x512xf32>
    tpu.vector_store %arg8[%c16_35, %c0_36], %85 {strides = array<i32>} : memref<144x512xf32, #tpu.memory_space<vmem>>, vector<16x512xf32>,
    %c15_i32_37 = arith.constant 15 : i32
    %87 = tpu.dynamic_rotate %74 by %c15_i32_37 dim 1 : vector<16x512xf32>, i32 -> vector<16x512xf32>
    %cst_38 = arith.constant 0.000000e+00 : f32
    %88 = vector.shape_cast %16 : vector<1x512xi1> to vector<1x512xi1>
    %89 = vector.broadcast %88 : vector<1x512xi1> to vector<16x512xi1>
    %90 = vector.broadcast %cst_38 : f32 to vector<16x512xf32>
    %91 = arith.select %89, %87, %90 : vector<16x512xi1>, vector<16x512xf32>
    %c32_39 = arith.constant 32 : index
    %c0_40 = arith.constant 0 : index
    %92 = vector.load %arg8[%c32_39, %c0_40] : memref<144x512xf32, #tpu.memory_space<vmem>>, vector<16x512xf32>
    tpu.vector_store %arg8[%c32_39, %c0_40], %91 {strides = array<i32>} : memref<144x512xf32, #tpu.memory_space<vmem>>, vector<16x512xf32>,
    %c1_i32_41 = arith.constant 1 : i32
    %93 = tpu.dynamic_rotate %74 by %c1_i32_41 dim 1 : vector<16x512xf32>, i32 -> vector<16x512xf32>
    %cst_42 = arith.constant 0.000000e+00 : f32
    %94 = vector.shape_cast %12 : vector<1x512xi1> to vector<1x512xi1>
    %95 = vector.broadcast %94 : vector<1x512xi1> to vector<16x512xi1>
    %96 = vector.broadcast %cst_42 : f32 to vector<16x512xf32>
    %97 = arith.select %95, %93, %96 : vector<16x512xi1>, vector<16x512xf32>
    %c48_43 = arith.constant 48 : index
    %c0_44 = arith.constant 0 : index
    %98 = vector.load %arg8[%c48_43, %c0_44] : memref<144x512xf32, #tpu.memory_space<vmem>>, vector<16x512xf32>
    tpu.vector_store %arg8[%c48_43, %c0_44], %97 {strides = array<i32>} : memref<144x512xf32, #tpu.memory_space<vmem>>, vector<16x512xf32>,
    %c64_45 = arith.constant 64 : index
    %c0_46 = arith.constant 0 : index
    %99 = vector.load %arg8[%c64_45, %c0_46] : memref<144x512xf32, #tpu.memory_space<vmem>>, vector<16x512xf32>
    tpu.vector_store %arg8[%c64_45, %c0_46], %74 {strides = array<i32>} : memref<144x512xf32, #tpu.memory_space<vmem>>, vector<16x512xf32>,
    %c511_i32_47 = arith.constant 511 : i32
    %100 = tpu.dynamic_rotate %74 by %c511_i32_47 dim 1 : vector<16x512xf32>, i32 -> vector<16x512xf32>
    %cst_48 = arith.constant 0.000000e+00 : f32
    %101 = vector.shape_cast %14 : vector<1x512xi1> to vector<1x512xi1>
    %102 = vector.broadcast %101 : vector<1x512xi1> to vector<16x512xi1>
    %103 = vector.broadcast %cst_48 : f32 to vector<16x512xf32>
    %104 = arith.select %102, %100, %103 : vector<16x512xi1>, vector<16x512xf32>
    %c80 = arith.constant 80 : index
    %c0_49 = arith.constant 0 : index
    %105 = vector.load %arg8[%c80, %c0_49] : memref<144x512xf32, #tpu.memory_space<vmem>>, vector<16x512xf32>
    tpu.vector_store %arg8[%c80, %c0_49], %104 {strides = array<i32>} : memref<144x512xf32, #tpu.memory_space<vmem>>, vector<16x512xf32>,
    %c497_i32_50 = arith.constant 497 : i32
    %106 = tpu.dynamic_rotate %74 by %c497_i32_50 dim 1 : vector<16x512xf32>, i32 -> vector<16x512xf32>
    %cst_51 = arith.constant 0.000000e+00 : f32
    %107 = vector.shape_cast %17 : vector<1x512xi1> to vector<1x512xi1>
    %108 = vector.broadcast %107 : vector<1x512xi1> to vector<16x512xi1>
    %109 = vector.broadcast %cst_51 : f32 to vector<16x512xf32>
    %110 = arith.select %108, %106, %109 : vector<16x512xi1>, vector<16x512xf32>
    %c96 = arith.constant 96 : index
    %c0_52 = arith.constant 0 : index
    %111 = vector.load %arg8[%c96, %c0_52] : memref<144x512xf32, #tpu.memory_space<vmem>>, vector<16x512xf32>
    tpu.vector_store %arg8[%c96, %c0_52], %110 {strides = array<i32>} : memref<144x512xf32, #tpu.memory_space<vmem>>, vector<16x512xf32>,
    %c496_i32_53 = arith.constant 496 : i32
    %112 = tpu.dynamic_rotate %74 by %c496_i32_53 dim 1 : vector<16x512xf32>, i32 -> vector<16x512xf32>
    %cst_54 = arith.constant 0.000000e+00 : f32
    %113 = vector.shape_cast %10 : vector<1x512xi1> to vector<1x512xi1>
    %114 = vector.broadcast %113 : vector<1x512xi1> to vector<16x512xi1>
    %115 = vector.broadcast %cst_54 : f32 to vector<16x512xf32>
    %116 = arith.select %114, %112, %115 : vector<16x512xi1>, vector<16x512xf32>
    %c112 = arith.constant 112 : index
    %c0_55 = arith.constant 0 : index
    %117 = vector.load %arg8[%c112, %c0_55] : memref<144x512xf32, #tpu.memory_space<vmem>>, vector<16x512xf32>
    tpu.vector_store %arg8[%c112, %c0_55], %116 {strides = array<i32>} : memref<144x512xf32, #tpu.memory_space<vmem>>, vector<16x512xf32>,
    %c495_i32_56 = arith.constant 495 : i32
    %118 = tpu.dynamic_rotate %74 by %c495_i32_56 dim 1 : vector<16x512xf32>, i32 -> vector<16x512xf32>
    %cst_57 = arith.constant 0.000000e+00 : f32
    %119 = vector.shape_cast %18 : vector<1x512xi1> to vector<1x512xi1>
    %120 = vector.broadcast %119 : vector<1x512xi1> to vector<16x512xi1>
    %121 = vector.broadcast %cst_57 : f32 to vector<16x512xf32>
    %122 = arith.select %120, %118, %121 : vector<16x512xi1>, vector<16x512xf32>
    %c128 = arith.constant 128 : index
    %c0_58 = arith.constant 0 : index
    %123 = vector.load %arg8[%c128, %c0_58] : memref<144x512xf32, #tpu.memory_space<vmem>>, vector<16x512xf32>
    tpu.vector_store %arg8[%c128, %c0_58], %122 {strides = array<i32>} : memref<144x512xf32, #tpu.memory_space<vmem>>, vector<16x512xf32>,
    %c0_59 = arith.constant 0 : index
    %c0_60 = arith.constant 0 : index
    %124 = vector.load %arg4[%c0_59, %c0_60] : memref<8x144xf32, #tpu.memory_space<vmem>>, vector<8x144xf32>
    %c0_61 = arith.constant 0 : index
    %c0_62 = arith.constant 0 : index
    %125 = vector.load %arg8[%c0_61, %c0_62] : memref<144x512xf32, #tpu.memory_space<vmem>>, vector<144x512xf32>
    %cst_63 = arith.constant dense<0.000000e+00> : vector<8x512xf32>
    %126 = tpu.matmul %124, %125, %cst_63 {dimension_numbers = #tpu.dot_dimension_numbers<[1], [0], [0], [1], [0, 0, 1, 1], [], []>} : vector<8x144xf32>, vector<144x512xf32>, vector<8x512xf32> -> vector<8x512xf32>
    %c0_64 = arith.constant 0 : index
    %c0_65 = arith.constant 0 : index
    %127 = vector.load %arg5[%c0_64, %c0_65] : memref<8x1xf32, #tpu.memory_space<vmem>>, vector<8x1xf32>
    %128 = vector.broadcast %127 : vector<8x1xf32> to vector<8x512xf32>
    %129 = arith.addf %126, %128 : vector<8x512xf32>
    %c0_66 = arith.constant 0 : index
    %c0_67 = arith.constant 0 : index
    %130 = vector.load %arg6[%c0_66, %c0_67] : memref<8x512xf32, #tpu.memory_space<vmem>>, vector<8x512xf32>
    tpu.vector_store %arg6[%c0_66, %c0_67], %129 {strides = array<i32>} : memref<8x512xf32, #tpu.memory_space<vmem>>, vector<8x512xf32>,
    return
  }
  func.func @transform_0(%arg0: i32) -> (i32, i32) {
    %c0_i32 = arith.constant 0 : i32
    %c0_i32_0 = arith.constant 0 : i32
    return %c0_i32, %arg0 : i32, i32
  }
  func.func @transform_1(%arg0: i32) -> (i32, i32) {
    %c0_i32 = arith.constant 0 : i32
    %c0_i32_0 = arith.constant 0 : i32
    %c0_i32_1 = arith.constant 0 : i32
    return %c0_i32, %c0_i32_0 : i32, i32
  }
  func.func @transform_2(%arg0: i32) -> (i32, i32) {
    %c0_i32 = arith.constant 0 : i32
    %c0_i32_0 = arith.constant 0 : i32
    %c0_i32_1 = arith.constant 0 : i32
    return %c0_i32, %c0_i32_0 : i32, i32
  }
  func.func @transform_3(%arg0: i32) -> (i32, i32) {
    %c0_i32 = arith.constant 0 : i32
    %c0_i32_0 = arith.constant 0 : i32
    %c0_i32_1 = arith.constant 0 : i32
    return %c0_i32, %c0_i32_0 : i32, i32
  }
  func.func @transform_4(%arg0: i32) -> (i32, i32) {
    %c0_i32 = arith.constant 0 : i32
    %c0_i32_0 = arith.constant 0 : i32
    %c0_i32_1 = arith.constant 0 : i32
    return %c0_i32, %c0_i32_0 : i32, i32
  }
  func.func @transform_5(%arg0: i32) -> (i32, i32) {
    %c0_i32 = arith.constant 0 : i32
    %c0_i32_0 = arith.constant 0 : i32
    return %c0_i32, %arg0 : i32, i32
  }
}

</mosaic_0001>

<llo_original>
// kernel: tpu_custom_call.1
$region0: #{tpu_custom_call.1}
  #allocation0 [shape = 'u32[]', space=smem, size = 0x4, offset = 0x4, fixed_abs, tag = 'smem constant byte address 0x4 - core index']
  #allocation1 [shape = 'u32[144,128]{1,0:T(1,128)}', space=vmem, size = 0x12000, scoped, tag = 'internal scratch']
  #allocation2 [shape = 'f32[72,512]{1,0:T(8,128)}', space=vmem, size = 0x24000, scoped, tag = 'scratch operand']
  #allocation3 [shape = 'f32[144,512]{1,0:T(8,128)}', space=vmem, size = 0x48000, scoped, tag = 'scratch operand']
  %s0 = inlined_call_operand.hbm [shape: f32[8,512], index: 0, kind: input, shape index: {}]
  %s1 = inlined_call_operand.vmem [shape: f32[16,72], index: 1, kind: input, shape index: {}]
  %s2 = inlined_call_operand.vmem [shape: f32[16,1], index: 2, kind: input, shape index: {}]
  %s3 = inlined_call_operand.vmem [shape: f32[8,144], index: 3, kind: input, shape index: {}]
  %s4 = inlined_call_operand.vmem [shape: f32[8,1], index: 4, kind: input, shape index: {}]
  %s5 = inlined_call_operand.hbm [shape: f32[8,512], index: 5, kind: output, shape index: {}]
  %s6 = sld [smem:[#allocation0]]
  $region34: #{tpu_custom_call.1} parent=0
    _
  %s8 = ssub.s32 1, %s6
  %s9 = scalar_select 0, %s8, %s6
  $region1: #{tpu_custom_call.1} parent=0
    #allocation4 [shape = 'u8[16384]{0}', space=vmem, size = 0x4000, scoped, tag = 'input window, operand 0, single buffered']
    #allocation5 [shape = 's32[1]{0}', space=sflag, size = 0x4, scoped, tag = 'scoped memory for tpu_custom_call.1']
    #allocation6 [shape = 's32[1]{0}', space=sflag, size = 0x4, scoped, tag = 'scoped memory for tpu_custom_call.1']
    #allocation7 [shape = 'u8[16384]{0}', space=vmem, size = 0x4000, scoped, tag = 'output window, operand 0, single buffered']
    %10 = vsyncpa [#allocation5], 0
    %11 = vsyncpa [#allocation6], 0
    // Predicated region
    $region2: #{tpu_custom_call.1} parent=1 // pred_check
      _
    $region3: #{tpu_custom_call.1} parent=1 // pred_check_branch
      %13 = sbr.rel (0) target = $region5
    $region4: #{tpu_custom_call.1} parent=1 // pred_region
      %s15 = ssub.s32 512, 512
      %16 = vsyncadd [#allocation5], %s15
      %s18 = sshll.u32 [#allocation4], 4
      %s19 = int_to_ptr.vmem [resolvable:$true] %s18
      %21 = dma.hbm_to_vmem [thread:$0]  %s0, 512, %s19, [#allocation5]
    $region5: #{tpu_custom_call.1} parent=1 // pred_fallthru
      _
    // Predicated region
    $region6: #{tpu_custom_call.1} parent=1 // pred_check
      _
    $region7: #{tpu_custom_call.1} parent=1 // pred_check_branch
      %23 = sbr.rel (0) target = $region9
    $region8: #{tpu_custom_call.1} parent=1 // pred_region
      _
    $region9: #{tpu_custom_call.1} parent=1 // pred_fallthru
      _
    // Predicated region
    $region10: #{tpu_custom_call.1} parent=1 // pred_check
      _
    $region11: #{tpu_custom_call.1} parent=1 // pred_check_branch
      %25 = sbr.rel (0) target = $region13
    $region12: #{tpu_custom_call.1} parent=1 // pred_region
      _
    $region13: #{tpu_custom_call.1} parent=1 // pred_fallthru
      _
    // Predicated region
    $region14: #{tpu_custom_call.1} parent=1 // pred_check
      _
    $region15: #{tpu_custom_call.1} parent=1 // pred_check_branch
      %27 = sbr.rel (0) target = $region17
    $region16: #{tpu_custom_call.1} parent=1 // pred_region
      _
    $region17: #{tpu_custom_call.1} parent=1 // pred_fallthru
      _
    // Predicated region
    $region18: #{tpu_custom_call.1} parent=1 // pred_check
      _
    $region19: #{tpu_custom_call.1} parent=1 // pred_check_branch
      %29 = sbr.rel (0) target = $region21
    $region20: #{tpu_custom_call.1} parent=1 // pred_region
      _
    $region21: #{tpu_custom_call.1} parent=1 // pred_fallthru
      _
    // Predicated region
    $region22: #{tpu_custom_call.1} parent=1 // pred_check
      _
    $region23: #{tpu_custom_call.1} parent=1 // pred_check_branch
      %31 = sbr.rel (0) target = $region25
    $region24: #{tpu_custom_call.1} parent=1 // pred_region
      %32 = dma.done [#allocation5], 512
    $region25: #{tpu_custom_call.1} parent=1 // pred_fallthru
      _
    %v33 = vlaneseq
    %v34 = vand.u32 %v33, 127
    %v35 = vadd.s32 %v34, 128
    %v36 = vadd.s32 %v34, 256
    %v37 = vadd.s32 %v34, 384
    %v38 = vand.u32 %v34, 255
    %v39 = vand.u32 %v35, 255
    %v40 = vand.u32 %v36, 255
    %v41 = vand.u32 %v37, 255
    %v42 = vshra.s32 %v38, 4
    %v43 = vshra.s32 %v39, 4
    %v44 = vshra.s32 %v40, 4
    %v45 = vshra.s32 %v41, 4
    %v46 = vand.u32 %v38, 15
    %v47 = vand.u32 %v39, 15
    %v48 = vand.u32 %v40, 15
    %v49 = vand.u32 %v41, 15
    %vm50 = vcmp.ge.s32.totalorder %v42, 1
    %vm51 = vcmp.ge.s32.totalorder %v43, 1
    %vm52 = vcmp.ge.s32.totalorder %v44, 1
    %vm53 = vcmp.ge.s32.totalorder %v45, 1
    %vm54 = vcmp.le.s32.totalorder %v42, 14
    %vm55 = vcmp.le.s32.totalorder %v43, 14
    %vm56 = vcmp.le.s32.totalorder %v44, 14
    %vm57 = vcmp.le.s32.totalorder %v45, 14
    %vm58 = vcmp.ge.s32.totalorder %v46, 1
    %vm59 = vcmp.ge.s32.totalorder %v47, 1
    %vm60 = vcmp.ge.s32.totalorder %v48, 1
    %vm61 = vcmp.ge.s32.totalorder %v49, 1
    %vm62 = vcmp.le.s32.totalorder %v46, 14
    %vm63 = vcmp.le.s32.totalorder %v47, 14
    %vm64 = vcmp.le.s32.totalorder %v48, 14
    %vm65 = vcmp.le.s32.totalorder %v49, 14
    %vm66 = vmand %vm50, %vm58
    %vm67 = vmand %vm51, %vm59
    %vm68 = vmand %vm52, %vm60
    %vm69 = vmand %vm53, %vm61
    %vm70 = vmand %vm50, %vm62
    %vm71 = vmand %vm51, %vm63
    %vm72 = vmand %vm52, %vm64
    %vm73 = vmand %vm53, %vm65
    %vm74 = vmand %vm54, %vm58
    %vm75 = vmand %vm55, %vm59
    %vm76 = vmand %vm56, %vm60
    %vm77 = vmand %vm57, %vm61
    %vm78 = vmand %vm54, %vm62
    %vm79 = vmand %vm55, %vm63
    %vm80 = vmand %vm56, %vm64
    %vm81 = vmand %vm57, %vm65
    %v82 = vld [vmem:[#allocation4] sm:$0xff]
    %v83 = vld [vmem:[#allocation4 + $0x8] sm:$0xff]
    %v84 = vld [vmem:[#allocation4 + $0x10] sm:$0xff]
    %v85 = vld [vmem:[#allocation4 + $0x18] sm:$0xff]
    %86 = vrot.lane.b32.xlu0 %v82, 17
    %v87 = vpop.permute.xlu0 %86
    %88 = vrot.lane.b32.xlu0 %v83, 17
    %v89 = vpop.permute.xlu0 %88
    %90 = vrot.lane.b32.xlu0 %v84, 17
    %v91 = vpop.permute.xlu0 %90
    %92 = vrot.lane.b32.xlu0 %v85, 17
    %v93 = vpop.permute.xlu0 %92
    %vm94 = vcmp.lt.s32.totalorder %v34, 17
    %v95 = vsel %vm94, %v91, %v93
    %v96 = vsel %vm94, %v89, %v91
    %v97 = vsel %vm94, %v87, %v89
    %v98 = vsel %vm94, %v93, %v87
    %v99 = vsel %vm66, 1, 0
    %v100 = vsel %vm67, 1, 0
    %v101 = vsel %vm68, 1, 0
    %v102 = vsel %vm69, 1, 0
    %vm103 = vcmp.eq.s32.totalorder %v99, 1
    %vm104 = vcmp.eq.s32.totalorder %v100, 1
    %vm105 = vcmp.eq.s32.totalorder %v101, 1
    %vm106 = vcmp.eq.s32.totalorder %v102, 1
    %v107 = vsel %vm103, %v98, 0.0
    %v108 = vsel %vm104, %v97, 0.0
    %v109 = vsel %vm105, %v96, 0.0
    %v110 = vsel %vm106, %v95, 0.0
    %111 = vst [vmem:[#allocation2] sm:$0xff] %v107
    %112 = vst [vmem:[#allocation2 + $0x8] sm:$0xff] %v108
    %113 = vst [vmem:[#allocation2 + $0x10] sm:$0xff] %v109
    %114 = vst [vmem:[#allocation2 + $0x18] sm:$0xff] %v110
    %115 = vrot.lane.b32.xlu0 %v82, 16
    %v116 = vpop.permute.xlu0 %115
    %117 = vrot.lane.b32.xlu0 %v83, 16
    %v118 = vpop.permute.xlu0 %117
    %119 = vrot.lane.b32.xlu0 %v84, 16
    %v120 = vpop.permute.xlu0 %119
    %121 = vrot.lane.b32.xlu0 %v85, 16
    %v122 = vpop.permute.xlu0 %121
    %vm123 = vcmp.lt.s32.totalorder %v34, 16
    %v124 = vsel %vm123, %v120, %v122
    %v125 = vsel %vm123, %v118, %v120
    %v126 = vsel %vm123, %v116, %v118
    %v127 = vsel %vm123, %v122, %v116
    %v128 = vsel %vm50, 1, 0
    %v129 = vsel %vm51, 1, 0
    %v130 = vsel %vm52, 1, 0
    %v131 = vsel %vm53, 1, 0
    %vm132 = vcmp.eq.s32.totalorder %v128, 1
    %vm133 = vcmp.eq.s32.totalorder %v129, 1
    %vm134 = vcmp.eq.s32.totalorder %v130, 1
    %vm135 = vcmp.eq.s32.totalorder %v131, 1
    %v136 = vsel %vm132, %v127, 0.0
    %v137 = vsel %vm133, %v126, 0.0
    %v138 = vsel %vm134, %v125, 0.0
    %v139 = vsel %vm135, %v124, 0.0
    %140 = vst [vmem:[#allocation2 + $0x20] sm:$0xff] %v136
    %141 = vst [vmem:[#allocation2 + $0x28] sm:$0xff] %v137
    %142 = vst [vmem:[#allocation2 + $0x30] sm:$0xff] %v138
    %143 = vst [vmem:[#allocation2 + $0x38] sm:$0xff] %v139
    %144 = vrot.lane.b32.xlu0 %v82, 15
    %v145 = vpop.permute.xlu0 %144
    %146 = vrot.lane.b32.xlu0 %v83, 15
    %v147 = vpop.permute.xlu0 %146
    %148 = vrot.lane.b32.xlu0 %v84, 15
    %v149 = vpop.permute.xlu0 %148
    %150 = vrot.lane.b32.xlu0 %v85, 15
    %v151 = vpop.permute.xlu0 %150
    %vm152 = vcmp.lt.s32.totalorder %v34, 15
    %v153 = vsel %vm152, %v149, %v151
    %v154 = vsel %vm152, %v147, %v149
    %v155 = vsel %vm152, %v145, %v147
    %v156 = vsel %vm152, %v151, %v145
    %v157 = vsel %vm70, 1, 0
    %v158 = vsel %vm71, 1, 0
    %v159 = vsel %vm72, 1, 0
    %v160 = vsel %vm73, 1, 0
    %vm161 = vcmp.eq.s32.totalorder %v157, 1
    %vm162 = vcmp.eq.s32.totalorder %v158, 1
    %vm163 = vcmp.eq.s32.totalorder %v159, 1
    %vm164 = vcmp.eq.s32.totalorder %v160, 1
    %v165 = vsel %vm161, %v156, 0.0
    %v166 = vsel %vm162, %v155, 0.0
    %v167 = vsel %vm163, %v154, 0.0
    %v168 = vsel %vm164, %v153, 0.0
    %169 = vst [vmem:[#allocation2 + $0x40] sm:$0xff] %v165
    %170 = vst [vmem:[#allocation2 + $0x48] sm:$0xff] %v166
    %171 = vst [vmem:[#allocation2 + $0x50] sm:$0xff] %v167
    %172 = vst [vmem:[#allocation2 + $0x58] sm:$0xff] %v168
    %173 = vrot.lane.b32.xlu0 %v82, 1
    %v174 = vpop.permute.xlu0 %173
    %175 = vrot.lane.b32.xlu0 %v83, 1
    %v176 = vpop.permute.xlu0 %175
    %177 = vrot.lane.b32.xlu0 %v84, 1
    %v178 = vpop.permute.xlu0 %177
    %179 = vrot.lane.b32.xlu0 %v85, 1
    %v180 = vpop.permute.xlu0 %179
    %vm181 = vcmp.lt.s32.totalorder %v34, 1
    %v182 = vsel %vm181, %v178, %v180
    %v183 = vsel %vm181, %v176, %v178
    %v184 = vsel %vm181, %v174, %v176
    %v185 = vsel %vm181, %v180, %v174
    %v186 = vsel %vm58, 1, 0
    %v187 = vsel %vm59, 1, 0
    %v188 = vsel %vm60, 1, 0
    %v189 = vsel %vm61, 1, 0
    %vm190 = vcmp.eq.s32.totalorder %v186, 1
    %vm191 = vcmp.eq.s32.totalorder %v187, 1
    %vm192 = vcmp.eq.s32.totalorder %v188, 1
    %vm193 = vcmp.eq.s32.totalorder %v189, 1
    %v194 = vsel %vm190, %v185, 0.0
    %v195 = vsel %vm191, %v184, 0.0
    %v196 = vsel %vm192, %v183, 0.0
    %v197 = vsel %vm193, %v182, 0.0
    %198 = vst [vmem:[#allocation2 + $0x60] sm:$0xff] %v194
    %199 = vst [vmem:[#allocation2 + $0x68] sm:$0xff] %v195
    %200 = vst [vmem:[#allocation2 + $0x70] sm:$0xff] %v196
    %201 = vst [vmem:[#allocation2 + $0x78] sm:$0xff] %v197
    %202 = vst [vmem:[#allocation2 + $0x80] sm:$0xff] %v82
    %203 = vst [vmem:[#allocation2 + $0x88] sm:$0xff] %v83
    %204 = vst [vmem:[#allocation2 + $0x90] sm:$0xff] %v84
    %205 = vst [vmem:[#allocation2 + $0x98] sm:$0xff] %v85
    %206 = vrot.lane.b32.xlu0 %v82, 127
    %v207 = vpop.permute.xlu0 %206
    %208 = vrot.lane.b32.xlu0 %v83, 127
    %v209 = vpop.permute.xlu0 %208
    %210 = vrot.lane.b32.xlu0 %v84, 127
    %v211 = vpop.permute.xlu0 %210
    %212 = vrot.lane.b32.xlu0 %v85, 127
    %v213 = vpop.permute.xlu0 %212
    %vm214 = vcmp.lt.s32.totalorder %v34, 127
    %v215 = vsel %vm214, %v211, %v213
    %v216 = vsel %vm214, %v209, %v211
    %v217 = vsel %vm214, %v207, %v209
    %v218 = vsel %vm214, %v213, %v207
    %v219 = vsel %vm62, 1, 0
    %v220 = vsel %vm63, 1, 0
    %v221 = vsel %vm64, 1, 0
    %v222 = vsel %vm65, 1, 0
    %vm223 = vcmp.eq.s32.totalorder %v219, 1
    %vm224 = vcmp.eq.s32.totalorder %v220, 1
    %vm225 = vcmp.eq.s32.totalorder %v221, 1
    %vm226 = vcmp.eq.s32.totalorder %v222, 1
    %v227 = vsel %vm223, %v217, 0.0
    %v228 = vsel %vm224, %v216, 0.0
    %v229 = vsel %vm225, %v215, 0.0
    %v230 = vsel %vm226, %v218, 0.0
    %231 = vst [vmem:[#allocation2 + $0xa0] sm:$0xff] %v227
    %232 = vst [vmem:[#allocation2 + $0xa8] sm:$0xff] %v228
    %233 = vst [vmem:[#allocation2 + $0xb0] sm:$0xff] %v229
    %234 = vst [vmem:[#allocation2 + $0xb8] sm:$0xff] %v230
    %235 = vrot.lane.b32.xlu0 %v82, 113
    %v236 = vpop.permute.xlu0 %235
    %237 = vrot.lane.b32.xlu0 %v83, 113
    %v238 = vpop.permute.xlu0 %237
    %239 = vrot.lane.b32.xlu0 %v84, 113
    %v240 = vpop.permute.xlu0 %239
    %241 = vrot.lane.b32.xlu0 %v85, 113
    %v242 = vpop.permute.xlu0 %241
    %vm243 = vcmp.lt.s32.totalorder %v34, 113
    %v244 = vsel %vm243, %v240, %v242
    %v245 = vsel %vm243, %v238, %v240
    %v246 = vsel %vm243, %v236, %v238
    %v247 = vsel %vm243, %v242, %v236
    %v248 = vsel %vm74, 1, 0
    %v249 = vsel %vm75, 1, 0
    %v250 = vsel %vm76, 1, 0
    %v251 = vsel %vm77, 1, 0
    %vm252 = vcmp.eq.s32.totalorder %v248, 1
    %vm253 = vcmp.eq.s32.totalorder %v249, 1
    %vm254 = vcmp.eq.s32.totalorder %v250, 1
    %vm255 = vcmp.eq.s32.totalorder %v251, 1
    %v256 = vsel %vm252, %v246, 0.0
    %v257 = vsel %vm253, %v245, 0.0
    %v258 = vsel %vm254, %v244, 0.0
    %v259 = vsel %vm255, %v247, 0.0
    %260 = vst [vmem:[#allocation2 + $0xc0] sm:$0xff] %v256
    %261 = vst [vmem:[#allocation2 + $0xc8] sm:$0xff] %v257
    %262 = vst [vmem:[#allocation2 + $0xd0] sm:$0xff] %v258
    %263 = vst [vmem:[#allocation2 + $0xd8] sm:$0xff] %v259
    %264 = vrot.lane.b32.xlu0 %v82, 112
    %v265 = vpop.permute.xlu0 %264
    %266 = vrot.lane.b32.xlu0 %v83, 112
    %v267 = vpop.permute.xlu0 %266
    %268 = vrot.lane.b32.xlu0 %v84, 112
    %v269 = vpop.permute.xlu0 %268
    %270 = vrot.lane.b32.xlu0 %v85, 112
    %v271 = vpop.permute.xlu0 %270
    %vm272 = vcmp.lt.s32.totalorder %v34, 112
    %v273 = vsel %vm272, %v269, %v271
    %v274 = vsel %vm272, %v267, %v269
    %v275 = vsel %vm272, %v265, %v267
    %v276 = vsel %vm272, %v271, %v265
    %v277 = vsel %vm54, 1, 0
    %v278 = vsel %vm55, 1, 0
    %v279 = vsel %vm56, 1, 0
    %v280 = vsel %vm57, 1, 0
    %vm281 = vcmp.eq.s32.totalorder %v277, 1
    %vm282 = vcmp.eq.s32.totalorder %v278, 1
    %vm283 = vcmp.eq.s32.totalorder %v279, 1
    %vm284 = vcmp.eq.s32.totalorder %v280, 1
    %v285 = vsel %vm281, %v275, 0.0
    %v286 = vsel %vm282, %v274, 0.0
    %v287 = vsel %vm283, %v273, 0.0
    %v288 = vsel %vm284, %v276, 0.0
    %289 = vst [vmem:[#allocation2 + $0xe0] sm:$0xff] %v285
    %290 = vst [vmem:[#allocation2 + $0xe8] sm:$0xff] %v286
    %291 = vst [vmem:[#allocation2 + $0xf0] sm:$0xff] %v287
    %292 = vst [vmem:[#allocation2 + $0xf8] sm:$0xff] %v288
    %293 = vrot.lane.b32.xlu0 %v82, 111
    %v294 = vpop.permute.xlu0 %293
    %295 = vrot.lane.b32.xlu0 %v83, 111
    %v296 = vpop.permute.xlu0 %295
    %297 = vrot.lane.b32.xlu0 %v84, 111
    %v298 = vpop.permute.xlu0 %297
    %299 = vrot.lane.b32.xlu0 %v85, 111
    %v300 = vpop.permute.xlu0 %299
    %vm301 = vcmp.lt.s32.totalorder %v34, 111
    %v302 = vsel %vm301, %v298, %v300
    %v303 = vsel %vm301, %v296, %v298
    %v304 = vsel %vm301, %v294, %v296
    %v305 = vsel %vm301, %v300, %v294
    %v306 = vsel %vm78, 1, 0
    %v307 = vsel %vm79, 1, 0
    %v308 = vsel %vm80, 1, 0
    %v309 = vsel %vm81, 1, 0
    %vm310 = vcmp.eq.s32.totalorder %v306, 1
    %vm311 = vcmp.eq.s32.totalorder %v307, 1
    %vm312 = vcmp.eq.s32.totalorder %v308, 1
    %vm313 = vcmp.eq.s32.totalorder %v309, 1
    %v314 = vsel %vm310, %v304, 0.0
    %v315 = vsel %vm311, %v303, 0.0
    %v316 = vsel %vm312, %v302, 0.0
    %v317 = vsel %vm313, %v305, 0.0
    %318 = vst [vmem:[#allocation2 + $0x100] sm:$0xff] %v314
    %319 = vst [vmem:[#allocation2 + $0x108] sm:$0xff] %v315
    %320 = vst [vmem:[#allocation2 + $0x110] sm:$0xff] %v316
    %321 = vst [vmem:[#allocation2 + $0x118] sm:$0xff] %v317
    %v322 = vld [vmem:[%s1] sm:$0xff]
    %v323 = vld [vmem:[%s1 + $0x8] sm:$0xff]
    %v324 = vld [vmem:[#allocation2] sm:$0xff]
    %v325 = vld [vmem:[#allocation2 + $0x8] sm:$0xff]
    %v326 = vld [vmem:[#allocation2 + $0x10] sm:$0xff]
    %v327 = vld [vmem:[#allocation2 + $0x18] sm:$0xff]
    %v328 = vld [vmem:[#allocation2 + $0x20] sm:$0xff]
    %v329 = vld [vmem:[#allocation2 + $0x28] sm:$0xff]
    %v330 = vld [vmem:[#allocation2 + $0x30] sm:$0xff]
    %v331 = vld [vmem:[#allocation2 + $0x38] sm:$0xff]
    %v332 = vld [vmem:[#allocation2 + $0x40] sm:$0xff]
    %v333 = vld [vmem:[#allocation2 + $0x48] sm:$0xff]
    %v334 = vld [vmem:[#allocation2 + $0x50] sm:$0xff]
    %v335 = vld [vmem:[#allocation2 + $0x58] sm:$0xff]
    %v336 = vld [vmem:[#allocation2 + $0x60] sm:$0xff]
    %v337 = vld [vmem:[#allocation2 + $0x68] sm:$0xff]
    %v338 = vld [vmem:[#allocation2 + $0x70] sm:$0xff]
    %v339 = vld [vmem:[#allocation2 + $0x78] sm:$0xff]
    %v340 = vld [vmem:[#allocation2 + $0x80] sm:$0xff]
    %v341 = vld [vmem:[#allocation2 + $0x88] sm:$0xff]
    %v342 = vld [vmem:[#allocation2 + $0x90] sm:$0xff]
    %v343 = vld [vmem:[#allocation2 + $0x98] sm:$0xff]
    %v344 = vld [vmem:[#allocation2 + $0xa0] sm:$0xff]
    %v345 = vld [vmem:[#allocation2 + $0xa8] sm:$0xff]
    %v346 = vld [vmem:[#allocation2 + $0xb0] sm:$0xff]
    %v347 = vld [vmem:[#allocation2 + $0xb8] sm:$0xff]
    %v348 = vld [vmem:[#allocation2 + $0xc0] sm:$0xff]
    %v349 = vld [vmem:[#allocation2 + $0xc8] sm:$0xff]
    %v350 = vld [vmem:[#allocation2 + $0xd0] sm:$0xff]
    %v351 = vld [vmem:[#allocation2 + $0xd8] sm:$0xff]
    %v352 = vld [vmem:[#allocation2 + $0xe0] sm:$0xff]
    %v353 = vld [vmem:[#allocation2 + $0xe8] sm:$0xff]
    %v354 = vld [vmem:[#allocation2 + $0xf0] sm:$0xff]
    %v355 = vld [vmem:[#allocation2 + $0xf8] sm:$0xff]
    %v356 = vld [vmem:[#allocation2 + $0x100] sm:$0xff]
    %v357 = vld [vmem:[#allocation2 + $0x108] sm:$0xff]
    %v358 = vld [vmem:[#allocation2 + $0x110] sm:$0xff]
    %v359 = vld [vmem:[#allocation2 + $0x118] sm:$0xff]
    %v360 = vld [vmem:[%s2] sm:$0xff]
    %v361 = vld [vmem:[%s2 + $0x8] sm:$0xff]
    %363 = vset.pattern.permute.xlu0 0
    %364 = vperm.xlu0 %363, %v360
    %v365 = vpop.permute.xlu0 %364
    %368 = vset.pattern.permute.xlu0 0
    %369 = vperm.xlu0 %368, %v361
    %v370 = vpop.permute.xlu0 %369
    %vm372 = vcmask 588800
    %v374 = vsel %vm372, %v322, 0
    %v377 = vsel %vm372, %v323, 0
    %379 = vmatprep.subr.mxu0 %v325
    %380 = vmatpush1.msra.mxu0 %v324
    %381 = vmatprep.subr.mxu0 %v329
    %382 = vmatpush1.msra.mxu0 %v328
    %383 = vmatprep.subr.mxu0 %v333
    %384 = vmatpush1.msra.mxu0 %v332
    %385 = vmatprep.subr.mxu0 %v337
    %386 = vmatpush1.msra.mxu0 %v336
    %387 = vmatprep.subr.mxu0 %v341
    %388 = vmatpush1.msra.mxu0 %v340
    %389 = vmatprep.subr.mxu0 %v345
    %390 = vmatpush1.msra.mxu0 %v344
    %391 = vmatprep.subr.mxu0 %v349
    %392 = vmatpush1.msra.mxu0 %v348
    %393 = vmatprep.subr.mxu0 %v353
    %394 = vmatpush1.msra.mxu0 %v352
    %395 = vmatprep.subr.mxu0 %v357
    %396 = vmatpush1.msra.mxu0 %v356
    %397 = vmatprep.subr.mxu0 0.0
    %398 = vmatpush1.msra.mxu0 0.0
    %399 = vmatprep.subr.mxu0 0.0
    %400 = vmatpush1.msra.mxu0 0.0
    %401 = vmatprep.subr.mxu0 0.0
    %402 = vmatpush1.msra.mxu0 0.0
    %403 = vmatprep.subr.mxu0 0.0
    %404 = vmatpush1.msra.mxu0 0.0
    %405 = vmatprep.subr.mxu0 0.0
    %406 = vmatpush1.msra.mxu0 0.0
    %407 = vmatprep.subr.mxu0 0.0
    %408 = vmatpush1.msra.mxu0 0.0
    %409 = vmatprep.subr.mxu0 0.0
    %410 = vmatpush1.msra.mxu0 0.0
    %411 = vmatprep.subr.mxu0 0.0
    %412 = vmatpush1.msra.mxu0 0.0
    %413 = vmatprep.subr.mxu0 0.0
    %414 = vmatpush1.msra.mxu0 0.0
    %415 = vmatprep.subr.mxu0 0.0
    %416 = vmatpush1.msra.mxu0 0.0
    %417 = vmatprep.subr.mxu0 0.0
    %418 = vmatpush1.msra.mxu0 0.0
    %419 = vmatprep.subr.mxu0 0.0
    %420 = vmatpush1.msra.mxu0 0.0
    %421 = vmatprep.subr.mxu0 0.0
    %422 = vmatpush1.msra.mxu0 0.0
    %423 = vmatprep.subr.mxu0 0.0
    %424 = vmatpush1.msra.mxu0 0.0
    %425 = vmatprep.subr.mxu0 0.0
    %426 = vmatpush1.msra.mxu0 0.0
    %427 = vmatprep.subr.mxu0 0.0
    %428 = vmatpush1.msra.mxu0 0.0
    %429 = vmatprep.subr.mxu0 0.0
    %430 = vmatpush1.msra.mxu0 0.0
    %431 = vmatprep.subr.mxu0 0.0
    %432 = vmatpush1.msra.mxu0 0.0
    %433 = vmatprep.subr.mxu0 0.0
    %434 = vmatpush1.msra.mxu0 0.0
    %435 = vmatprep.subr.mxu0 0.0
    %436 = vmatpush1.msra.mxu0 0.0
    %437 = vmatprep.subr.mxu0 0.0
    %438 = vmatpush1.msra.mxu0 0.0
    %439 = vmatprep.subr.mxu0 0.0
    %440 = vmatpush1.msra.mxu0 0.0
    %441 = vmatprep.subr.mxu0 0.0
    %442 = vmatpush1.msra.mxu0 0.0
    %443 = vmatprep.mubr.f32.mxu0 0.0
    %444 = vmatmul.mubr.f32.gmra.mrb[0].mxu0 %v374
    %v445 = vpop.f32.mrb[0].mxu0
    %v446 = vadd.f32 %v365, %v445
    %v447 = vpop.f32.mrb[0].mxu0
    %v448 = vadd.f32 %v365, %v447
    %449 = vmatprep.mubr.f32.mxu0 0.0
    %450 = vmatmul.mubr.f32.gmra.mrb[0].mxu0 %v377
    %v451 = vpop.f32.mrb[0].mxu0
    %v452 = vadd.f32 %v370, %v451
    %v453 = vpop.f32.mrb[0].mxu0
    %v454 = vadd.f32 %v370, %v453
    %455 = vdwg.mxu0
    %456 = vmatprep.subr.mxu0 %v327
    %457 = vmatpush1.msra.mxu0 %v326
    %458 = vmatprep.subr.mxu0 %v331
    %459 = vmatpush1.msra.mxu0 %v330
    %460 = vmatprep.subr.mxu0 %v335
    %461 = vmatpush1.msra.mxu0 %v334
    %462 = vmatprep.subr.mxu0 %v339
    %463 = vmatpush1.msra.mxu0 %v338
    %464 = vmatprep.subr.mxu0 %v343
    %465 = vmatpush1.msra.mxu0 %v342
    %466 = vmatprep.subr.mxu0 %v347
    %467 = vmatpush1.msra.mxu0 %v346
    %468 = vmatprep.subr.mxu0 %v351
    %469 = vmatpush1.msra.mxu0 %v350
    %470 = vmatprep.subr.mxu0 %v355
    %471 = vmatpush1.msra.mxu0 %v354
    %472 = vmatprep.subr.mxu0 %v359
    %473 = vmatpush1.msra.mxu0 %v358
    %474 = vmatprep.subr.mxu0 0.0
    %475 = vmatpush1.msra.mxu0 0.0
    %476 = vmatprep.subr.mxu0 0.0
    %477 = vmatpush1.msra.mxu0 0.0
    %478 = vmatprep.subr.mxu0 0.0
    %479 = vmatpush1.msra.mxu0 0.0
    %480 = vmatprep.subr.mxu0 0.0
    %481 = vmatpush1.msra.mxu0 0.0
    %482 = vmatprep.subr.mxu0 0.0
    %483 = vmatpush1.msra.mxu0 0.0
    %484 = vmatprep.subr.mxu0 0.0
    %485 = vmatpush1.msra.mxu0 0.0
    %486 = vmatprep.subr.mxu0 0.0
    %487 = vmatpush1.msra.mxu0 0.0
    %488 = vmatprep.subr.mxu0 0.0
    %489 = vmatpush1.msra.mxu0 0.0
    %490 = vmatprep.subr.mxu0 0.0
    %491 = vmatpush1.msra.mxu0 0.0
    %492 = vmatprep.subr.mxu0 0.0
    %493 = vmatpush1.msra.mxu0 0.0
    %494 = vmatprep.subr.mxu0 0.0
    %495 = vmatpush1.msra.mxu0 0.0
    %496 = vmatprep.subr.mxu0 0.0
    %497 = vmatpush1.msra.mxu0 0.0
    %498 = vmatprep.subr.mxu0 0.0
    %499 = vmatpush1.msra.mxu0 0.0
    %500 = vmatprep.subr.mxu0 0.0
    %501 = vmatpush1.msra.mxu0 0.0
    %502 = vmatprep.subr.mxu0 0.0
    %503 = vmatpush1.msra.mxu0 0.0
    %504 = vmatprep.subr.mxu0 0.0
    %505 = vmatpush1.msra.mxu0 0.0
    %506 = vmatprep.subr.mxu0 0.0
    %507 = vmatpush1.msra.mxu0 0.0
    %508 = vmatprep.subr.mxu0 0.0
    %509 = vmatpush1.msra.mxu0 0.0
    %510 = vmatprep.subr.mxu0 0.0
    %511 = vmatpush1.msra.mxu0 0.0
    %512 = vmatprep.subr.mxu0 0.0
    %513 = vmatpush1.msra.mxu0 0.0
    %514 = vmatprep.subr.mxu0 0.0
    %515 = vmatpush1.msra.mxu0 0.0
    %516 = vmatprep.subr.mxu0 0.0
    %517 = vmatpush1.msra.mxu0 0.0
    %518 = vmatprep.subr.mxu0 0.0
    %519 = vmatpush1.msra.mxu0 0.0
    %520 = vmatprep.mubr.f32.mxu0 0.0
    %521 = vmatmul.mubr.f32.gmra.mrb[0].mxu0 %v374
    %v522 = vpop.f32.mrb[0].mxu0
    %v523 = vadd.f32 %v365, %v522
    %v524 = vpop.f32.mrb[0].mxu0
    %v525 = vadd.f32 %v365, %v524
    %526 = vmatprep.mubr.f32.mxu0 0.0
    %527 = vmatmul.mubr.f32.gmra.mrb[0].mxu0 %v377
    %v528 = vpop.f32.mrb[0].mxu0
    %v529 = vadd.f32 %v370, %v528
    %v530 = vpop.f32.mrb[0].mxu0
    %v531 = vadd.f32 %v370, %v530
    %532 = vdwg.mxu0
    %533 = vrot.lane.b32.xlu0 %v446, 17
    %v534 = vpop.permute.xlu0 %533
    %535 = vrot.lane.b32.xlu0 %v452, 17
    %v536 = vpop.permute.xlu0 %535
    %537 = vrot.lane.b32.xlu0 %v448, 17
    %v538 = vpop.permute.xlu0 %537
    %539 = vrot.lane.b32.xlu0 %v454, 17
    %v540 = vpop.permute.xlu0 %539
    %541 = vrot.lane.b32.xlu0 %v523, 17
    %v542 = vpop.permute.xlu0 %541
    %543 = vrot.lane.b32.xlu0 %v529, 17
    %v544 = vpop.permute.xlu0 %543
    %545 = vrot.lane.b32.xlu0 %v525, 17
    %v546 = vpop.permute.xlu0 %545
    %547 = vrot.lane.b32.xlu0 %v531, 17
    %v548 = vpop.permute.xlu0 %547
    %v549 = vsel %vm94, %v542, %v546
    %v550 = vsel %vm94, %v544, %v548
    %v551 = vsel %vm94, %v538, %v542
    %v552 = vsel %vm94, %v540, %v544
    %v553 = vsel %vm94, %v534, %v538
    %v554 = vsel %vm94, %v536, %v540
    %v555 = vsel %vm94, %v546, %v534
    %v556 = vsel %vm94, %v548, %v536
    %v557 = vsel %vm103, %v555, 0.0
    %v558 = vsel %vm104, %v553, 0.0
    %v559 = vsel %vm105, %v551, 0.0
    %v560 = vsel %vm106, %v549, 0.0
    %v561 = vsel %vm103, %v556, 0.0
    %v562 = vsel %vm104, %v554, 0.0
    %v563 = vsel %vm105, %v552, 0.0
    %v564 = vsel %vm106, %v550, 0.0
    %565 = vst [vmem:[#allocation3] sm:$0xff] %v557
    %566 = vst [vmem:[#allocation3 + $0x8] sm:$0xff] %v558
    %567 = vst [vmem:[#allocation3 + $0x10] sm:$0xff] %v559
    %568 = vst [vmem:[#allocation3 + $0x18] sm:$0xff] %v560
    %569 = vst [vmem:[#allocation3 + $0x20] sm:$0xff] %v561
    %570 = vst [vmem:[#allocation3 + $0x28] sm:$0xff] %v562
    %571 = vst [vmem:[#allocation3 + $0x30] sm:$0xff] %v563
    %572 = vst [vmem:[#allocation3 + $0x38] sm:$0xff] %v564
    %573 = vrot.lane.b32.xlu0 %v446, 16
    %v574 = vpop.permute.xlu0 %573
    %575 = vrot.lane.b32.xlu0 %v452, 16
    %v576 = vpop.permute.xlu0 %575
    %577 = vrot.lane.b32.xlu0 %v448, 16
    %v578 = vpop.permute.xlu0 %577
    %579 = vrot.lane.b32.xlu0 %v454, 16
    %v580 = vpop.permute.xlu0 %579
    %581 = vrot.lane.b32.xlu0 %v523, 16
    %v582 = vpop.permute.xlu0 %581
    %583 = vrot.lane.b32.xlu0 %v529, 16
    %v584 = vpop.permute.xlu0 %583
    %585 = vrot.lane.b32.xlu0 %v525, 16
    %v586 = vpop.permute.xlu0 %585
    %587 = vrot.lane.b32.xlu0 %v531, 16
    %v588 = vpop.permute.xlu0 %587
    %v589 = vsel %vm123, %v582, %v586
    %v590 = vsel %vm123, %v584, %v588
    %v591 = vsel %vm123, %v578, %v582
    %v592 = vsel %vm123, %v580, %v584
    %v593 = vsel %vm123, %v574, %v578
    %v594 = vsel %vm123, %v576, %v580
    %v595 = vsel %vm123, %v586, %v574
    %v596 = vsel %vm123, %v588, %v576
    %v597 = vsel %vm132, %v595, 0.0
    %v598 = vsel %vm133, %v593, 0.0
    %v599 = vsel %vm134, %v591, 0.0
    %v600 = vsel %vm135, %v589, 0.0
    %v601 = vsel %vm132, %v596, 0.0
    %v602 = vsel %vm133, %v594, 0.0
    %v603 = vsel %vm134, %v592, 0.0
    %v604 = vsel %vm135, %v590, 0.0
    %605 = vst [vmem:[#allocation3 + $0x40] sm:$0xff] %v597
    %606 = vst [vmem:[#allocation3 + $0x48] sm:$0xff] %v598
    %607 = vst [vmem:[#allocation3 + $0x50] sm:$0xff] %v599
    %608 = vst [vmem:[#allocation3 + $0x58] sm:$0xff] %v600
    %609 = vst [vmem:[#allocation3 + $0x60] sm:$0xff] %v601
    %610 = vst [vmem:[#allocation3 + $0x68] sm:$0xff] %v602
    %611 = vst [vmem:[#allocation3 + $0x70] sm:$0xff] %v603
    %612 = vst [vmem:[#allocation3 + $0x78] sm:$0xff] %v604
    %613 = vrot.lane.b32.xlu0 %v446, 15
    %v614 = vpop.permute.xlu0 %613
    %615 = vrot.lane.b32.xlu0 %v452, 15
    %v616 = vpop.permute.xlu0 %615
    %617 = vrot.lane.b32.xlu0 %v448, 15
    %v618 = vpop.permute.xlu0 %617
    %619 = vrot.lane.b32.xlu0 %v454, 15
    %v620 = vpop.permute.xlu0 %619
    %621 = vrot.lane.b32.xlu0 %v523, 15
    %v622 = vpop.permute.xlu0 %621
    %623 = vrot.lane.b32.xlu0 %v529, 15
    %v624 = vpop.permute.xlu0 %623
    %625 = vrot.lane.b32.xlu0 %v525, 15
    %v626 = vpop.permute.xlu0 %625
    %627 = vrot.lane.b32.xlu0 %v531, 15
    %v628 = vpop.permute.xlu0 %627
    %v629 = vsel %vm152, %v622, %v626
    %v630 = vsel %vm152, %v624, %v628
    %v631 = vsel %vm152, %v618, %v622
    %v632 = vsel %vm152, %v620, %v624
    %v633 = vsel %vm152, %v614, %v618
    %v634 = vsel %vm152, %v616, %v620
    %v635 = vsel %vm152, %v626, %v614
    %v636 = vsel %vm152, %v628, %v616
    %v637 = vsel %vm161, %v635, 0.0
    %v638 = vsel %vm162, %v633, 0.0
    %v639 = vsel %vm163, %v631, 0.0
    %v640 = vsel %vm164, %v629, 0.0
    %v641 = vsel %vm161, %v636, 0.0
    %v642 = vsel %vm162, %v634, 0.0
    %v643 = vsel %vm163, %v632, 0.0
    %v644 = vsel %vm164, %v630, 0.0
    %645 = vst [vmem:[#allocation3 + $0x80] sm:$0xff] %v637
    %646 = vst [vmem:[#allocation3 + $0x88] sm:$0xff] %v638
    %647 = vst [vmem:[#allocation3 + $0x90] sm:$0xff] %v639
    %648 = vst [vmem:[#allocation3 + $0x98] sm:$0xff] %v640
    %649 = vst [vmem:[#allocation3 + $0xa0] sm:$0xff] %v641
    %650 = vst [vmem:[#allocation3 + $0xa8] sm:$0xff] %v642
    %651 = vst [vmem:[#allocation3 + $0xb0] sm:$0xff] %v643
    %652 = vst [vmem:[#allocation3 + $0xb8] sm:$0xff] %v644
    %653 = vrot.lane.b32.xlu0 %v446, 1
    %v654 = vpop.permute.xlu0 %653
    %655 = vrot.lane.b32.xlu0 %v452, 1
    %v656 = vpop.permute.xlu0 %655
    %657 = vrot.lane.b32.xlu0 %v448, 1
    %v658 = vpop.permute.xlu0 %657
    %659 = vrot.lane.b32.xlu0 %v454, 1
    %v660 = vpop.permute.xlu0 %659
    %661 = vrot.lane.b32.xlu0 %v523, 1
    %v662 = vpop.permute.xlu0 %661
    %663 = vrot.lane.b32.xlu0 %v529, 1
    %v664 = vpop.permute.xlu0 %663
    %665 = vrot.lane.b32.xlu0 %v525, 1
    %v666 = vpop.permute.xlu0 %665
    %667 = vrot.lane.b32.xlu0 %v531, 1
    %v668 = vpop.permute.xlu0 %667
    %v669 = vsel %vm181, %v662, %v666
    %v670 = vsel %vm181, %v664, %v668
    %v671 = vsel %vm181, %v658, %v662
    %v672 = vsel %vm181, %v660, %v664
    %v673 = vsel %vm181, %v654, %v658
    %v674 = vsel %vm181, %v656, %v660
    %v675 = vsel %vm181, %v666, %v654
    %v676 = vsel %vm181, %v668, %v656
    %v677 = vsel %vm190, %v675, 0.0
    %v678 = vsel %vm191, %v673, 0.0
    %v679 = vsel %vm192, %v671, 0.0
    %v680 = vsel %vm193, %v669, 0.0
    %v681 = vsel %vm190, %v676, 0.0
    %v682 = vsel %vm191, %v674, 0.0
    %v683 = vsel %vm192, %v672, 0.0
    %v684 = vsel %vm193, %v670, 0.0
    %685 = vst [vmem:[#allocation3 + $0xc0] sm:$0xff] %v677
    %686 = vst [vmem:[#allocation3 + $0xc8] sm:$0xff] %v678
    %687 = vst [vmem:[#allocation3 + $0xd0] sm:$0xff] %v679
    %688 = vst [vmem:[#allocation3 + $0xd8] sm:$0xff] %v680
    %689 = vst [vmem:[#allocation3 + $0xe0] sm:$0xff] %v681
    %690 = vst [vmem:[#allocation3 + $0xe8] sm:$0xff] %v682
    %691 = vst [vmem:[#allocation3 + $0xf0] sm:$0xff] %v683
    %692 = vst [vmem:[#allocation3 + $0xf8] sm:$0xff] %v684
    %693 = vst [vmem:[#allocation3 + $0x100] sm:$0xff] %v446
    %694 = vst [vmem:[#allocation3 + $0x108] sm:$0xff] %v448
    %695 = vst [vmem:[#allocation3 + $0x110] sm:$0xff] %v523
    %696 = vst [vmem:[#allocation3 + $0x118] sm:$0xff] %v525
    %697 = vst [vmem:[#allocation3 + $0x120] sm:$0xff] %v452
    %698 = vst [vmem:[#allocation3 + $0x128] sm:$0xff] %v454
    %699 = vst [vmem:[#allocation3 + $0x130] sm:$0xff] %v529
    %700 = vst [vmem:[#allocation3 + $0x138] sm:$0xff] %v531
    %701 = vrot.lane.b32.xlu0 %v446, 127
    %v702 = vpop.permute.xlu0 %701
    %703 = vrot.lane.b32.xlu0 %v452, 127
    %v704 = vpop.permute.xlu0 %703
    %705 = vrot.lane.b32.xlu0 %v448, 127
    %v706 = vpop.permute.xlu0 %705
    %707 = vrot.lane.b32.xlu0 %v454, 127
    %v708 = vpop.permute.xlu0 %707
    %709 = vrot.lane.b32.xlu0 %v523, 127
    %v710 = vpop.permute.xlu0 %709
    %711 = vrot.lane.b32.xlu0 %v529, 127
    %v712 = vpop.permute.xlu0 %711
    %713 = vrot.lane.b32.xlu0 %v525, 127
    %v714 = vpop.permute.xlu0 %713
    %715 = vrot.lane.b32.xlu0 %v531, 127
    %v716 = vpop.permute.xlu0 %715
    %v717 = vsel %vm214, %v710, %v714
    %v718 = vsel %vm214, %v712, %v716
    %v719 = vsel %vm214, %v706, %v710
    %v720 = vsel %vm214, %v708, %v712
    %v721 = vsel %vm214, %v702, %v706
    %v722 = vsel %vm214, %v704, %v708
    %v723 = vsel %vm214, %v714, %v702
    %v724 = vsel %vm214, %v716, %v704
    %v725 = vsel %vm223, %v721, 0.0
    %v726 = vsel %vm224, %v719, 0.0
    %v727 = vsel %vm225, %v717, 0.0
    %v728 = vsel %vm226, %v723, 0.0
    %v729 = vsel %vm223, %v722, 0.0
    %v730 = vsel %vm224, %v720, 0.0
    %v731 = vsel %vm225, %v718, 0.0
    %v732 = vsel %vm226, %v724, 0.0
    %733 = vst [vmem:[#allocation3 + $0x140] sm:$0xff] %v725
    %734 = vst [vmem:[#allocation3 + $0x148] sm:$0xff] %v726
    %735 = vst [vmem:[#allocation3 + $0x150] sm:$0xff] %v727
    %736 = vst [vmem:[#allocation3 + $0x158] sm:$0xff] %v728
    %737 = vst [vmem:[#allocation3 + $0x160] sm:$0xff] %v729
    %738 = vst [vmem:[#allocation3 + $0x168] sm:$0xff] %v730
    %739 = vst [vmem:[#allocation3 + $0x170] sm:$0xff] %v731
    %740 = vst [vmem:[#allocation3 + $0x178] sm:$0xff] %v732
    %741 = vrot.lane.b32.xlu0 %v446, 113
    %v742 = vpop.permute.xlu0 %741
    %743 = vrot.lane.b32.xlu0 %v452, 113
    %v744 = vpop.permute.xlu0 %743
    %745 = vrot.lane.b32.xlu0 %v448, 113
    %v746 = vpop.permute.xlu0 %745
    %747 = vrot.lane.b32.xlu0 %v454, 113
    %v748 = vpop.permute.xlu0 %747
    %749 = vrot.lane.b32.xlu0 %v523, 113
    %v750 = vpop.permute.xlu0 %749
    %751 = vrot.lane.b32.xlu0 %v529, 113
    %v752 = vpop.permute.xlu0 %751
    %753 = vrot.lane.b32.xlu0 %v525, 113
    %v754 = vpop.permute.xlu0 %753
    %755 = vrot.lane.b32.xlu0 %v531, 113
    %v756 = vpop.permute.xlu0 %755
    %v757 = vsel %vm243, %v750, %v754
    %v758 = vsel %vm243, %v752, %v756
    %v759 = vsel %vm243, %v746, %v750
    %v760 = vsel %vm243, %v748, %v752
    %v761 = vsel %vm243, %v742, %v746
    %v762 = vsel %vm243, %v744, %v748
    %v763 = vsel %vm243, %v754, %v742
    %v764 = vsel %vm243, %v756, %v744
    %v765 = vsel %vm252, %v761, 0.0
    %v766 = vsel %vm253, %v759, 0.0
    %v767 = vsel %vm254, %v757, 0.0
    %v768 = vsel %vm255, %v763, 0.0
    %v769 = vsel %vm252, %v762, 0.0
    %v770 = vsel %vm253, %v760, 0.0
    %v771 = vsel %vm254, %v758, 0.0
    %v772 = vsel %vm255, %v764, 0.0
    %773 = vst [vmem:[#allocation3 + $0x180] sm:$0xff] %v765
    %774 = vst [vmem:[#allocation3 + $0x188] sm:$0xff] %v766
    %775 = vst [vmem:[#allocation3 + $0x190] sm:$0xff] %v767
    %776 = vst [vmem:[#allocation3 + $0x198] sm:$0xff] %v768
    %777 = vst [vmem:[#allocation3 + $0x1a0] sm:$0xff] %v769
    %778 = vst [vmem:[#allocation3 + $0x1a8] sm:$0xff] %v770
    %779 = vst [vmem:[#allocation3 + $0x1b0] sm:$0xff] %v771
    %780 = vst [vmem:[#allocation3 + $0x1b8] sm:$0xff] %v772
    %781 = vrot.lane.b32.xlu0 %v446, 112
    %v782 = vpop.permute.xlu0 %781
    %783 = vrot.lane.b32.xlu0 %v452, 112
    %v784 = vpop.permute.xlu0 %783
    %785 = vrot.lane.b32.xlu0 %v448, 112
    %v786 = vpop.permute.xlu0 %785
    %787 = vrot.lane.b32.xlu0 %v454, 112
    %v788 = vpop.permute.xlu0 %787
    %789 = vrot.lane.b32.xlu0 %v523, 112
    %v790 = vpop.permute.xlu0 %789
    %791 = vrot.lane.b32.xlu0 %v529, 112
    %v792 = vpop.permute.xlu0 %791
    %793 = vrot.lane.b32.xlu0 %v525, 112
    %v794 = vpop.permute.xlu0 %793
    %795 = vrot.lane.b32.xlu0 %v531, 112
    %v796 = vpop.permute.xlu0 %795
    %v797 = vsel %vm272, %v790, %v794
    %v798 = vsel %vm272, %v792, %v796
    %v799 = vsel %vm272, %v786, %v790
    %v800 = vsel %vm272, %v788, %v792
    %v801 = vsel %vm272, %v782, %v786
    %v802 = vsel %vm272, %v784, %v788
    %v803 = vsel %vm272, %v794, %v782
    %v804 = vsel %vm272, %v796, %v784
    %v805 = vsel %vm281, %v801, 0.0
    %v806 = vsel %vm282, %v799, 0.0
    %v807 = vsel %vm283, %v797, 0.0
    %v808 = vsel %vm284, %v803, 0.0
    %v809 = vsel %vm281, %v802, 0.0
    %v810 = vsel %vm282, %v800, 0.0
    %v811 = vsel %vm283, %v798, 0.0
    %v812 = vsel %vm284, %v804, 0.0
    %813 = vst [vmem:[#allocation3 + $0x1c0] sm:$0xff] %v805
    %814 = vst [vmem:[#allocation3 + $0x1c8] sm:$0xff] %v806
    %815 = vst [vmem:[#allocation3 + $0x1d0] sm:$0xff] %v807
    %816 = vst [vmem:[#allocation3 + $0x1d8] sm:$0xff] %v808
    %817 = vst [vmem:[#allocation3 + $0x1e0] sm:$0xff] %v809
    %818 = vst [vmem:[#allocation3 + $0x1e8] sm:$0xff] %v810
    %819 = vst [vmem:[#allocation3 + $0x1f0] sm:$0xff] %v811
    %820 = vst [vmem:[#allocation3 + $0x1f8] sm:$0xff] %v812
    %821 = vrot.lane.b32.xlu0 %v446, 111
    %v822 = vpop.permute.xlu0 %821
    %823 = vrot.lane.b32.xlu0 %v452, 111
    %v824 = vpop.permute.xlu0 %823
    %825 = vrot.lane.b32.xlu0 %v448, 111
    %v826 = vpop.permute.xlu0 %825
    %827 = vrot.lane.b32.xlu0 %v454, 111
    %v828 = vpop.permute.xlu0 %827
    %829 = vrot.lane.b32.xlu0 %v523, 111
    %v830 = vpop.permute.xlu0 %829
    %831 = vrot.lane.b32.xlu0 %v529, 111
    %v832 = vpop.permute.xlu0 %831
    %833 = vrot.lane.b32.xlu0 %v525, 111
    %v834 = vpop.permute.xlu0 %833
    %835 = vrot.lane.b32.xlu0 %v531, 111
    %v836 = vpop.permute.xlu0 %835
    %v837 = vsel %vm301, %v830, %v834
    %v838 = vsel %vm301, %v832, %v836
    %v839 = vsel %vm301, %v826, %v830
    %v840 = vsel %vm301, %v828, %v832
    %v841 = vsel %vm301, %v822, %v826
    %v842 = vsel %vm301, %v824, %v828
    %v843 = vsel %vm301, %v834, %v822
    %v844 = vsel %vm301, %v836, %v824
    %v845 = vsel %vm310, %v841, 0.0
    %v846 = vsel %vm311, %v839, 0.0
    %v847 = vsel %vm312, %v837, 0.0
    %v848 = vsel %vm313, %v843, 0.0
    %v849 = vsel %vm310, %v842, 0.0
    %v850 = vsel %vm311, %v840, 0.0
    %v851 = vsel %vm312, %v838, 0.0
    %v852 = vsel %vm313, %v844, 0.0
    %853 = vst [vmem:[#allocation3 + $0x200] sm:$0xff] %v845
    %854 = vst [vmem:[#allocation3 + $0x208] sm:$0xff] %v846
    %855 = vst [vmem:[#allocation3 + $0x210] sm:$0xff] %v847
    %856 = vst [vmem:[#allocation3 + $0x218] sm:$0xff] %v848
    %857 = vst [vmem:[#allocation3 + $0x220] sm:$0xff] %v849
    %858 = vst [vmem:[#allocation3 + $0x228] sm:$0xff] %v850
    %859 = vst [vmem:[#allocation3 + $0x230] sm:$0xff] %v851
    %860 = vst [vmem:[#allocation3 + $0x238] sm:$0xff] %v852
    %v861 = vld [vmem:[%s3] sm:$0xff]
    %v862 = vld [vmem:[%s3 + $0x8] sm:$0xff]
    %v863 = vld [vmem:[#allocation3] sm:$0xff]
    %v864 = vld [vmem:[#allocation3 + $0x8] sm:$0xff]
    %v865 = vld [vmem:[#allocation3 + $0x10] sm:$0xff]
    %v866 = vld [vmem:[#allocation3 + $0x18] sm:$0xff]
    %v867 = vld [vmem:[#allocation3 + $0x20] sm:$0xff]
    %v868 = vld [vmem:[#allocation3 + $0x28] sm:$0xff]
    %v869 = vld [vmem:[#allocation3 + $0x30] sm:$0xff]
    %v870 = vld [vmem:[#allocation3 + $0x38] sm:$0xff]
    %v871 = vld [vmem:[#allocation3 + $0x40] sm:$0xff]
    %v872 = vld [vmem:[#allocation3 + $0x48] sm:$0xff]
    %v873 = vld [vmem:[#allocation3 + $0x50] sm:$0xff]
    %v874 = vld [vmem:[#allocation3 + $0x58] sm:$0xff]
    %v875 = vld [vmem:[#allocation3 + $0x60] sm:$0xff]
    %v876 = vld [vmem:[#allocation3 + $0x68] sm:$0xff]
    %v877 = vld [vmem:[#allocation3 + $0x70] sm:$0xff]
    %v878 = vld [vmem:[#allocation3 + $0x78] sm:$0xff]
    %v879 = vld [vmem:[#allocation3 + $0x80] sm:$0xff]
    %v880 = vld [vmem:[#allocation3 + $0x88] sm:$0xff]
    %v881 = vld [vmem:[#allocation3 + $0x90] sm:$0xff]
    %v882 = vld [vmem:[#allocation3 + $0x98] sm:$0xff]
    %v883 = vld [vmem:[#allocation3 + $0xa0] sm:$0xff]
    %v884 = vld [vmem:[#allocation3 + $0xa8] sm:$0xff]
    %v885 = vld [vmem:[#allocation3 + $0xb0] sm:$0xff]
    %v886 = vld [vmem:[#allocation3 + $0xb8] sm:$0xff]
    %v887 = vld [vmem:[#allocation3 + $0xc0] sm:$0xff]
    %v888 = vld [vmem:[#allocation3 + $0xc8] sm:$0xff]
    %v889 = vld [vmem:[#allocation3 + $0xd0] sm:$0xff]
    %v890 = vld [vmem:[#allocation3 + $0xd8] sm:$0xff]
    %v891 = vld [vmem:[#allocation3 + $0xe0] sm:$0xff]
    %v892 = vld [vmem:[#allocation3 + $0xe8] sm:$0xff]
    %v893 = vld [vmem:[#allocation3 + $0xf0] sm:$0xff]
    %v894 = vld [vmem:[#allocation3 + $0xf8] sm:$0xff]
    %v895 = vld [vmem:[#allocation3 + $0x100] sm:$0xff]
    %v896 = vld [vmem:[#allocation3 + $0x108] sm:$0xff]
    %v897 = vld [vmem:[#allocation3 + $0x110] sm:$0xff]
    %v898 = vld [vmem:[#allocation3 + $0x118] sm:$0xff]
    %v899 = vld [vmem:[#allocation3 + $0x120] sm:$0xff]
    %v900 = vld [vmem:[#allocation3 + $0x128] sm:$0xff]
    %v901 = vld [vmem:[#allocation3 + $0x130] sm:$0xff]
    %v902 = vld [vmem:[#allocation3 + $0x138] sm:$0xff]
    %v903 = vld [vmem:[#allocation3 + $0x140] sm:$0xff]
    %v904 = vld [vmem:[#allocation3 + $0x148] sm:$0xff]
    %v905 = vld [vmem:[#allocation3 + $0x150] sm:$0xff]
    %v906 = vld [vmem:[#allocation3 + $0x158] sm:$0xff]
    %v907 = vld [vmem:[#allocation3 + $0x160] sm:$0xff]
    %v908 = vld [vmem:[#allocation3 + $0x168] sm:$0xff]
    %v909 = vld [vmem:[#allocation3 + $0x170] sm:$0xff]
    %v910 = vld [vmem:[#allocation3 + $0x178] sm:$0xff]
    %v911 = vld [vmem:[#allocation3 + $0x180] sm:$0xff]
    %v912 = vld [vmem:[#allocation3 + $0x188] sm:$0xff]
    %v913 = vld [vmem:[#allocation3 + $0x190] sm:$0xff]
    %v914 = vld [vmem:[#allocation3 + $0x198] sm:$0xff]
    %v915 = vld [vmem:[#allocation3 + $0x1a0] sm:$0xff]
    %v916 = vld [vmem:[#allocation3 + $0x1a8] sm:$0xff]
    %v917 = vld [vmem:[#allocation3 + $0x1b0] sm:$0xff]
    %v918 = vld [vmem:[#allocation3 + $0x1b8] sm:$0xff]
    %v919 = vld [vmem:[#allocation3 + $0x1c0] sm:$0xff]
    %v920 = vld [vmem:[#allocation3 + $0x1c8] sm:$0xff]
    %v921 = vld [vmem:[#allocation3 + $0x1d0] sm:$0xff]
    %v922 = vld [vmem:[#allocation3 + $0x1d8] sm:$0xff]
    %v923 = vld [vmem:[#allocation3 + $0x1e0] sm:$0xff]
    %v924 = vld [vmem:[#allocation3 + $0x1e8] sm:$0xff]
    %v925 = vld [vmem:[#allocation3 + $0x1f0] sm:$0xff]
    %v926 = vld [vmem:[#allocation3 + $0x1f8] sm:$0xff]
    %v927 = vld [vmem:[#allocation3 + $0x200] sm:$0xff]
    %v928 = vld [vmem:[#allocation3 + $0x208] sm:$0xff]
    %v929 = vld [vmem:[#allocation3 + $0x210] sm:$0xff]
    %v930 = vld [vmem:[#allocation3 + $0x218] sm:$0xff]
    %v931 = vld [vmem:[#allocation3 + $0x220] sm:$0xff]
    %v932 = vld [vmem:[#allocation3 + $0x228] sm:$0xff]
    %v933 = vld [vmem:[#allocation3 + $0x230] sm:$0xff]
    %v934 = vld [vmem:[#allocation3 + $0x238] sm:$0xff]
    %v935 = vld [vmem:[%s4] sm:$0xff]
    %937 = vset.pattern.permute.xlu0 0
    %938 = vperm.xlu0 %937, %v935
    %v939 = vpop.permute.xlu0 %938
    %vm941 = vcmask 130048
    %v943 = vsel %vm941, %v862, 0
    %945 = vmatprep.subr.mxu0 %v864
    %946 = vmatpush1.msra.mxu0 %v863
    %947 = vmatprep.subr.mxu0 %v868
    %948 = vmatpush1.msra.mxu0 %v867
    %949 = vmatprep.subr.mxu0 %v872
    %950 = vmatpush1.msra.mxu0 %v871
    %951 = vmatprep.subr.mxu0 %v876
    %952 = vmatpush1.msra.mxu0 %v875
    %953 = vmatprep.subr.mxu0 %v880
    %954 = vmatpush1.msra.mxu0 %v879
    %955 = vmatprep.subr.mxu0 %v884
    %956 = vmatpush1.msra.mxu0 %v883
    %957 = vmatprep.subr.mxu0 %v888
    %958 = vmatpush1.msra.mxu0 %v887
    %959 = vmatprep.subr.mxu0 %v892
    %960 = vmatpush1.msra.mxu0 %v891
    %961 = vmatprep.subr.mxu0 %v896
    %962 = vmatpush1.msra.mxu0 %v895
    %963 = vmatprep.subr.mxu0 %v900
    %964 = vmatpush1.msra.mxu0 %v899
    %965 = vmatprep.subr.mxu0 %v904
    %966 = vmatpush1.msra.mxu0 %v903
    %967 = vmatprep.subr.mxu0 %v908
    %968 = vmatpush1.msra.mxu0 %v907
    %969 = vmatprep.subr.mxu0 %v912
    %970 = vmatpush1.msra.mxu0 %v911
    %971 = vmatprep.subr.mxu0 %v916
    %972 = vmatpush1.msra.mxu0 %v915
    %973 = vmatprep.subr.mxu0 %v920
    %974 = vmatpush1.msra.mxu0 %v919
    %975 = vmatprep.subr.mxu0 %v924
    %976 = vmatpush1.msra.mxu0 %v923
    %977 = vmatprep.subr.mxu0 %v928
    %978 = vmatpush1.msra.mxu0 %v927
    %979 = vmatprep.subr.mxu0 %v932
    %980 = vmatpush1.msra.mxu0 %v931
    %981 = vmatprep.subr.mxu0 0.0
    %982 = vmatpush1.msra.mxu0 0.0
    %983 = vmatprep.subr.mxu0 0.0
    %984 = vmatpush1.msra.mxu0 0.0
    %985 = vmatprep.subr.mxu0 0.0
    %986 = vmatpush1.msra.mxu0 0.0
    %987 = vmatprep.subr.mxu0 0.0
    %988 = vmatpush1.msra.mxu0 0.0
    %989 = vmatprep.subr.mxu0 0.0
    %990 = vmatpush1.msra.mxu0 0.0
    %991 = vmatprep.subr.mxu0 0.0
    %992 = vmatpush1.msra.mxu0 0.0
    %993 = vmatprep.subr.mxu0 0.0
    %994 = vmatpush1.msra.mxu0 0.0
    %995 = vmatprep.subr.mxu0 0.0
    %996 = vmatpush1.msra.mxu0 0.0
    %997 = vmatprep.subr.mxu0 0.0
    %998 = vmatpush1.msra.mxu0 0.0
    %999 = vmatprep.subr.mxu0 0.0
    %1000 = vmatpush1.msra.mxu0 0.0
    %1001 = vmatprep.subr.mxu0 0.0
    %1002 = vmatpush1.msra.mxu0 0.0
    %1003 = vmatprep.subr.mxu0 0.0
    %1004 = vmatpush1.msra.mxu0 0.0
    %1005 = vmatprep.subr.mxu0 0.0
    %1006 = vmatpush1.msra.mxu0 0.0
    %1007 = vmatprep.subr.mxu0 0.0
    %1008 = vmatpush1.msra.mxu0 0.0
    %1009 = vmatprep.mubr.f32.mxu0 %v943
    %1010 = vmatmul.mubr.f32.gmra.mrb[0].mxu0 %v861
    %v1011 = vpop.f32.mrb[0].mxu0
    %v1012 = vadd.f32 %v939, %v1011
    %v1013 = vpop.f32.mrb[0].mxu0
    %v1014 = vadd.f32 %v939, %v1013
    %1015 = vdwg.mxu0
    %1016 = vmatprep.subr.mxu0 %v866
    %1017 = vmatpush1.msra.mxu0 %v865
    %1018 = vmatprep.subr.mxu0 %v870
    %1019 = vmatpush1.msra.mxu0 %v869
    %1020 = vmatprep.subr.mxu0 %v874
    %1021 = vmatpush1.msra.mxu0 %v873
    %1022 = vmatprep.subr.mxu0 %v878
    %1023 = vmatpush1.msra.mxu0 %v877
    %1024 = vmatprep.subr.mxu0 %v882
    %1025 = vmatpush1.msra.mxu0 %v881
    %1026 = vmatprep.subr.mxu0 %v886
    %1027 = vmatpush1.msra.mxu0 %v885
    %1028 = vmatprep.subr.mxu0 %v890
    %1029 = vmatpush1.msra.mxu0 %v889
    %1030 = vmatprep.subr.mxu0 %v894
    %1031 = vmatpush1.msra.mxu0 %v893
    %1032 = vmatprep.subr.mxu0 %v898
    %1033 = vmatpush1.msra.mxu0 %v897
    %1034 = vmatprep.subr.mxu0 %v902
    %1035 = vmatpush1.msra.mxu0 %v901
    %1036 = vmatprep.subr.mxu0 %v906
    %1037 = vmatpush1.msra.mxu0 %v905
    %1038 = vmatprep.subr.mxu0 %v910
    %1039 = vmatpush1.msra.mxu0 %v909
    %1040 = vmatprep.subr.mxu0 %v914
    %1041 = vmatpush1.msra.mxu0 %v913
    %1042 = vmatprep.subr.mxu0 %v918
    %1043 = vmatpush1.msra.mxu0 %v917
    %1044 = vmatprep.subr.mxu0 %v922
    %1045 = vmatpush1.msra.mxu0 %v921
    %1046 = vmatprep.subr.mxu0 %v926
    %1047 = vmatpush1.msra.mxu0 %v925
    %1048 = vmatprep.subr.mxu0 %v930
    %1049 = vmatpush1.msra.mxu0 %v929
    %1050 = vmatprep.subr.mxu0 %v934
    %1051 = vmatpush1.msra.mxu0 %v933
    %1052 = vmatprep.subr.mxu0 0.0
    %1053 = vmatpush1.msra.mxu0 0.0
    %1054 = vmatprep.subr.mxu0 0.0
    %1055 = vmatpush1.msra.mxu0 0.0
    %1056 = vmatprep.subr.mxu0 0.0
    %1057 = vmatpush1.msra.mxu0 0.0
    %1058 = vmatprep.subr.mxu0 0.0
    %1059 = vmatpush1.msra.mxu0 0.0
    %1060 = vmatprep.subr.mxu0 0.0
    %1061 = vmatpush1.msra.mxu0 0.0
    %1062 = vmatprep.subr.mxu0 0.0
    %1063 = vmatpush1.msra.mxu0 0.0
    %1064 = vmatprep.subr.mxu0 0.0
    %1065 = vmatpush1.msra.mxu0 0.0
    %1066 = vmatprep.subr.mxu0 0.0
    %1067 = vmatpush1.msra.mxu0 0.0
    %1068 = vmatprep.subr.mxu0 0.0
    %1069 = vmatpush1.msra.mxu0 0.0
    %1070 = vmatprep.subr.mxu0 0.0
    %1071 = vmatpush1.msra.mxu0 0.0
    %1072 = vmatprep.subr.mxu0 0.0
    %1073 = vmatpush1.msra.mxu0 0.0
    %1074 = vmatprep.subr.mxu0 0.0
    %1075 = vmatpush1.msra.mxu0 0.0
    %1076 = vmatprep.subr.mxu0 0.0
    %1077 = vmatpush1.msra.mxu0 0.0
    %1078 = vmatprep.subr.mxu0 0.0
    %1079 = vmatpush1.msra.mxu0 0.0
    %1080 = vmatprep.mubr.f32.mxu0 %v943
    %1081 = vmatmul.mubr.f32.gmra.mrb[0].mxu0 %v861
    %v1082 = vpop.f32.mrb[0].mxu0
    %v1083 = vadd.f32 %v939, %v1082
    %v1084 = vpop.f32.mrb[0].mxu0
    %v1085 = vadd.f32 %v939, %v1084
    %1086 = vdwg.mxu0
    %1087 = vst [vmem:[#allocation7] sm:$0xff] %v1012
    %1088 = vst [vmem:[#allocation7 + $0x8] sm:$0xff] %v1014
    %1089 = vst [vmem:[#allocation7 + $0x10] sm:$0xff] %v1083
    %1090 = vst [vmem:[#allocation7 + $0x18] sm:$0xff] %v1085
    // Predicated region
    $region26: #{tpu_custom_call.1} parent=1 // pred_check
      _
    $region27: #{tpu_custom_call.1} parent=1 // pred_check_branch
      %1092 = sbr.rel (0) target = $region29
    $region28: #{tpu_custom_call.1} parent=1 // pred_region
      %s1094 = ssub.s32 512, 512
      %1095 = vsyncadd [#allocation6], %s1094
      %s1097 = sshll.u32 [#allocation7], 4
      %s1098 = int_to_ptr.vmem [resolvable:$true] %s1097
      %1100 = dma.vmem_to_hbm [thread:$0]  %s1098, 512, %s5, [#allocation6]
    $region29: #{tpu_custom_call.1} parent=1 // pred_fallthru
      _
    // Predicated region
    $region30: #{tpu_custom_call.1} parent=1 // pred_check
      _
    $region31: #{tpu_custom_call.1} parent=1 // pred_check_branch
      %1102 = sbr.rel (0) target = $region33
    $region32: #{tpu_custom_call.1} parent=1 // pred_region
      %1103 = dma.done [#allocation6], 512
    $region33: #{tpu_custom_call.1} parent=1 // pred_fallthru
      _
    %1104 = vsyncpa [#allocation5], 1
    %1105 = vsyncpa [#allocation6], 1

</llo_original>
